<compile_context>
chip_gen: v7x
topology: tpu7x:2x2x1
jax: 0.10.0
libtpu: 0.0.40
codegen_flags: <defaults>
</compile_context>

<pallas_src>
from typing import NamedTuple

import jax
import jax.numpy as jnp
from jax.experimental import pallas as pl
from jax.experimental.pallas import tpu as pltpu

LANE = 128
BF16_SUBLANE = 16          # native bf16 vreg packing is (16, 128)
NEG_BIG = -1e30            # Python float, used only in the WRAPPER (never captured)


def _round_up(x, m):
    return ((x + m - 1) // m) * m


# ---------------------------------------------------------------------------
# Kernel
# ---------------------------------------------------------------------------
def _soft_dot_attention_kernel(h_ref, ctx_ref, bias_ref, w_in_t_ref, w_out_t_ref,
                               h_tilde_ref, attn_ref):
    h = h_ref[...]          # (TB, Qp)     bf16
    ctx = ctx_ref[...]      # (TB, Sp, Cp) bf16

    # target = linear_in(h): bf16 MXU matmul, f32 accumulation.
    target = jnp.dot(h, w_in_t_ref[...], preferred_element_type=jnp.float32)  # (TB, Cp)

    # scores[b,s] = sum_c ctx[b,s,c] * target[b,c]   (VPU multiply + XLU lane reduce)
    # ctx is promoted to f32 only at this single use site -- no long-lived f32
    # context copy shared with the weighted-context phase.
    scores = jnp.sum(ctx * target[:, None, :], axis=-1)          # (TB, Sp) f32
    scores = scores + bias_ref[...]    # additive mask bias: 0 (keep) / -1e30 (masked/pad)

    # softmax over seq_len (lane axis); finite -1e30 sentinel => no NaN rows.
    m = jnp.max(scores, axis=-1, keepdims=True)
    e = jnp.exp(scores - m)
    denom = jnp.sum(e, axis=-1, keepdims=True)
    attn = e * (1.0 / denom)           # one divide per row, then cheap broadcast multiply
    attn_ref[...] = attn

    # weighted_context[b,c] = sum_s attn[b,s] * ctx[b,s,c]:
    # bf16 products (packed VPU vregs on v6e/v7x), f32 accumulation at the sublane reduce.
    wprod = attn.astype(jnp.bfloat16)[:, :, None] * ctx           # (TB, Sp, Cp) bf16
    wc = jnp.sum(wprod.astype(jnp.float32), axis=1)               # (TB, Cp) f32

    # h_tilde = tanh(linear_out(cat([weighted_context, h], 1)))
    # Single fused MXU matmul against the pre-concatenated transposed weight.
    cat = jnp.concatenate([wc.astype(jnp.bfloat16), h], axis=-1)  # (TB, Cp+Qp) bf16
    pre = jnp.dot(cat, w_out_t_ref[...], preferred_element_type=jnp.float32)
    h_tilde_ref[...] = jnp.tanh(pre).astype(h_tilde_ref.dtype)


# ---------------------------------------------------------------------------
# One-time preparation (hoisted out of the per-step path)
# ---------------------------------------------------------------------------
def prepare_weights(w_in, w_out):
    """Transpose / split / pad / cast the weights once.

    w_in : (C, Q)    == linear_in.weight
    w_out: (Q, Q+C)  == linear_out.weight, columns ordered [weighted_context(C), h(Q)]
    Returns (w_in_T (Qp,Cp) bf16, fused w_out_T (Cp+Qp, Qp) bf16).
    """
    C, Q = w_in.shape
    Qp, Cp = _round_up(Q, LANE), _round_up(C, LANE)
    w_in_t = jnp.zeros((Qp, Cp), jnp.bfloat16).at[:Q, :C].set(
        w_in.T.astype(jnp.bfloat16))
    # Fused output projection: rows [0:Cp) act on weighted_context, [Cp:Cp+Qp) on h.
    w_out_t = jnp.zeros((Cp + Qp, Qp), jnp.bfloat16)
    w_out_t = w_out_t.at[:C, :Q].set(w_out[:, :C].T.astype(jnp.bfloat16))
    w_out_t = w_out_t.at[Cp:Cp + Q, :Q].set(w_out[:, C:].T.astype(jnp.bfloat16))
    return w_in_t, w_out_t


def _tile_config(Sp, Cp):
    """Pick batch tile + VMEM limit per TPU generation.

    v5e/v6e: 128 MiB VMEM -> bigger tiles (amortize ~0.35us/step, fill the MXU M dim).
    v7x (or unknown): 64 MiB VMEM -> ~3 MiB per context pipeline buffer, 32 MiB limit.
    """
    try:
        vmem_cap = int(pltpu.get_tpu_info().vmem_capacity_bytes)
    except Exception:
        vmem_cap = 64 * 1024 * 1024          # conservative fallback
    if vmem_cap >= 96 * 1024 * 1024:         # v5e / v6e
        budget, tb_max, vmem_limit = 6 << 20, 256, 64 << 20
    else:                                    # v7x or unknown
        budget, tb_max, vmem_limit = 3 << 20, 128, 32 << 20
    row_bytes = Sp * Cp * 2                  # bf16 context bytes per batch row
    tb = (budget // row_bytes) // BF16_SUBLANE * BF16_SUBLANE
    tb = max(BF16_SUBLANE, min(tb_max, tb))
    # Guard: even the minimum tile must fit the double-buffered pipeline.
    if 2 * tb * row_bytes > vmem_limit // 2:
        raise ValueError("context row (S*C) too large for VMEM double-buffering; "
                         "shard the sequence / ctx dims before calling this kernel")
    return tb, vmem_limit


class PreparedContext(NamedTuple):
    ctx: jax.Array       # (Bp, Sp, Cp) bf16, zero-padded
    bias: jax.Array      # (Bp, Sp) f32 additive mask bias (0 / -1e30)
    batch: int           # original B
    seq_len: int         # original S
    tb: int              # batch tile for the kernel grid
    vmem_limit: int


def prepare_context(context, mask=None):
    """Per-encoder-pass prep: pad + cast context, build the additive mask bias.

    In R2R the encoder context is reused on every decoder step, so this pad/cast
    is hoisted out of the per-step path.
    """
    B, S, C = context.shape
    Cp = _round_up(C, LANE)
    Sp = _round_up(S, BF16_SUBLANE)   # S sits on the SUBLANE axis of the ctx block:
                                      # pad to 16 (bf16 packing), NOT to 128.
    tb, vmem_limit = _tile_config(Sp, Cp)
    tb = min(tb, _round_up(B, BF16_SUBLANE))
    Bp = _round_up(B, tb)

    ctx_p = jnp.zeros((Bp, Sp, Cp), jnp.bfloat16).at[:B, :S, :C].set(
        context.astype(jnp.bfloat16))
    if mask is None:
        row_bias = jnp.zeros((B, S), jnp.float32)
    else:
        row_bias = jnp.where(mask.astype(bool), NEG_BIG, 0.0).astype(jnp.float32)
    # Padded seq positions and padded batch rows are fully masked (finite sentinel,
    # so fully-masked rows yield a uniform distribution instead of NaN).
    bias_p = jnp.full((Bp, Sp), NEG_BIG, jnp.float32).at[:B, :S].set(row_bias)
    return PreparedContext(ctx_p, bias_p, B, S, tb, vmem_limit)


# ---------------------------------------------------------------------------
# Per-step entry point
# ---------------------------------------------------------------------------
def soft_dot_attention(h, prepared_context, prepared_weights):
    """Default flag path of SoftDotAttention.forward.

    h: (B, Q).  Returns (h_tilde (B, Q) bf16, attn (B, S) f32).
    """
    B, Q = h.shape
    pc = prepared_context
    assert B == pc.batch, "batch mismatch between h and prepared context"
    w_in_t, w_out_t = prepared_weights
    Qp, Cp = w_in_t.shape
    Bp, Sp, _ = pc.ctx.shape
    tb = pc.tb

    # h is small -> per-call pad/cast is cheap.
    h_p = jnp.zeros((Bp, Qp), jnp.bfloat16).at[:B, :Q].set(h.astype(jnp.bfloat16))

    const = lambda i: (0, 0)
    h_tilde_p, attn_p = pl.pallas_call(
        _soft_dot_attention_kernel,
        out_shape=(jax.ShapeDtypeStruct((Bp, Qp), jnp.bfloat16),   # bf16 writeback
                   jax.ShapeDtypeStruct((Bp, Sp), jnp.float32)),
        grid=(Bp // tb,),
        in_specs=[
            pl.BlockSpec((tb, Qp), lambda i: (i, 0)),          # h (bf16)
            pl.BlockSpec((tb, Sp, Cp), lambda i: (i, 0, 0)),   # context (bf16)
            pl.BlockSpec((tb, Sp), lambda i: (i, 0)),          # additive mask bias (f32)
            pl.BlockSpec((Qp, Cp), const),                     # w_in^T       (VMEM-resident)
            pl.BlockSpec((Cp + Qp, Qp), const),                # fused w_out^T (VMEM-resident)
        ],
        out_specs=(pl.BlockSpec((tb, Qp), lambda i: (i, 0)),
                   pl.BlockSpec((tb, Sp), lambda i: (i, 0))),
        compiler_params=pltpu.CompilerParams(
            dimension_semantics=("parallel",),
            vmem_limit_bytes=pc.vmem_limit),
    )(h_p, pc.ctx, pc.bias, w_in_t, w_out_t)

    return h_tilde_p[:B, :Q], attn_p[:B, :pc.seq_len]


# ---------------------------------------------------------------------------
# Pure-JAX reference (mirrors the PyTorch forward, default flags)
# ---------------------------------------------------------------------------
def _reference(h, context, mask, w_in, w_out):
    """Uses bf16-rounded operands (f32 math) to match the kernel's input precision."""
    bf = lambda x: x.astype(jnp.bfloat16).astype(jnp.float32)
    h, context, w_in, w_out = bf(h), bf(context), bf(w_in), bf(w_out)
    target = h @ w_in.T                                    # (B, C)
    scores = jnp.einsum('bsc,bc->bs', context, target)     # (B, S)
    scores = jnp.where(mask, -jnp.inf, scores)
    attn = jax.nn.softmax(scores, axis=-1)
    wc = jnp.einsum('bs,bsc->bc', attn, context)           # (B, C)
    h_tilde = jnp.tanh(jnp.concatenate([wc, h], axis=1) @ w_out.T)
    return h_tilde, attn


if __name__ == "__main__":
    B, S, Q, C = 2, 8, 32, 32   # batch, seq_len, query_dim, ctx_dim

    key = jax.random.PRNGKey(0)
    k_h, k_ctx, k_win, k_wout = jax.random.split(key, 4)

    h = jax.random.normal(k_h, (B, Q), dtype=jnp.float32)
    context = jax.random.normal(k_ctx, (B, S, C), dtype=jnp.float32)
    # mask out the last two positions of every row (True => masked)
    mask = jnp.zeros((B, S), dtype=bool).at[:, -2:].set(True)

    # Parameter init (shapes from nn.Linear in __init__, bias=False).
    w_in = jax.random.normal(k_win, (C, Q), dtype=jnp.float32) * 0.1        # linear_in.weight
    w_out = jax.random.normal(k_wout, (Q, Q + C), dtype=jnp.float32) * 0.1  # linear_out.weight

    # One-time prep (reused across decoder steps in R2R).
    prepared_w = prepare_weights(w_in, w_out)
    prepared_ctx = prepare_context(context, mask)

    h_tilde, attn = soft_dot_attention(h, prepared_ctx, prepared_w)
    jax.block_until_ready((h_tilde, attn))

    ref_h_tilde, ref_attn = _reference(h, context, mask, w_in, w_out)
    h_tilde_f32 = h_tilde.astype(jnp.float32)
    assert jnp.allclose(h_tilde_f32, ref_h_tilde, atol=2e-2, rtol=2e-2), \
        float(jnp.max(jnp.abs(h_tilde_f32 - ref_h_tilde)))
    assert jnp.allclose(attn, ref_attn, atol=2e-2, rtol=2e-2), \
        float(jnp.max(jnp.abs(attn - ref_attn)))

    print("KERNEL_OK")
</pallas_src>

<mosaic_0001>
module attributes {stable_mosaic.version = 11 : i64} {
  func.func @_soft_dot_attention_kernel(%arg0: i32, %arg1: memref<16x128xbf16, #tpu.memory_space<vmem>>, %arg2: memref<16x16x128xbf16, #tpu.memory_space<vmem>>, %arg3: memref<16x16xf32, #tpu.memory_space<vmem>>, %arg4: memref<128x128xbf16, #tpu.memory_space<vmem>>, %arg5: memref<256x128xbf16, #tpu.memory_space<vmem>>, %arg6: memref<16x128xbf16, #tpu.memory_space<vmem>>, %arg7: memref<16x16xf32, #tpu.memory_space<vmem>>) attributes {dimension_semantics = [#tpu.dimension_semantics<parallel>], iteration_bounds = array<i64: 1>, scalar_prefetch = 0 : i64, scratch_operands = 0 : i64, tpu.core_type = #tpu.core_type<tc>, window_params = [{transform_indices = @transform_0, window_bounds = array<i64: 16, 128>}, {transform_indices = @transform_1, window_bounds = array<i64: 16, 16, 128>}, {transform_indices = @transform_2, window_bounds = array<i64: 16, 16>}, {pipeline_mode = #tpu.pipeline_mode<synchronous>, transform_indices = @transform_3, window_bounds = array<i64: 128, 128>}, {pipeline_mode = #tpu.pipeline_mode<synchronous>, transform_indices = @transform_4, window_bounds = array<i64: 256, 128>}, {transform_indices = @transform_5, window_bounds = array<i64: 16, 128>}, {transform_indices = @transform_6, window_bounds = array<i64: 16, 16>}]} {
    %c0 = arith.constant 0 : index
    %c0_0 = arith.constant 0 : index
    %0 = vector.load %arg1[%c0, %c0_0] : memref<16x128xbf16, #tpu.memory_space<vmem>>, vector<16x128xbf16>
    %c0_1 = arith.constant 0 : index
    %c0_2 = arith.constant 0 : index
    %c0_3 = arith.constant 0 : index
    %1 = vector.load %arg2[%c0_1, %c0_2, %c0_3] : memref<16x16x128xbf16, #tpu.memory_space<vmem>>, vector<16x16x128xbf16>
    %c0_4 = arith.constant 0 : index
    %c0_5 = arith.constant 0 : index
    %2 = vector.load %arg4[%c0_4, %c0_5] : memref<128x128xbf16, #tpu.memory_space<vmem>>, vector<128x128xbf16>
    %cst = arith.constant dense<0.000000e+00> : vector<16x128xf32>
    %3 = tpu.matmul %0, %2, %cst {dimension_numbers = #tpu.dot_dimension_numbers<[1], [0], [0], [1], [0, 0, 1, 1], [], []>} : vector<16x128xbf16>, vector<128x128xbf16>, vector<16x128xf32> -> vector<16x128xf32>
    %4 = vector.shape_cast %3 : vector<16x128xf32> to vector<16x1x128xf32>
    %5 = arith.extf %1 : vector<16x16x128xbf16> to vector<16x16x128xf32>
    %6 = vector.broadcast %4 : vector<16x1x128xf32> to vector<16x16x128xf32>
    %7 = arith.mulf %5, %6 : vector<16x16x128xf32>
    %cst_6 = arith.constant dense<0.000000e+00> : vector<16x16xf32>
    %8 = vector.multi_reduction <add>, %7, %cst_6 [2] : vector<16x16x128xf32> to vector<16x16xf32>
    %c0_7 = arith.constant 0 : index
    %c0_8 = arith.constant 0 : index
    %9 = vector.load %arg3[%c0_7, %c0_8] : memref<16x16xf32, #tpu.memory_space<vmem>>, vector<16x16xf32>
    %10 = arith.addf %8, %9 : vector<16x16xf32>
    %cst_9 = arith.constant dense<0xFF800000> : vector<16xf32>
    %11 = vector.multi_reduction <maximumf>, %10, %cst_9 [1] : vector<16x16xf32> to vector<16xf32>
    %12 = vector.shape_cast %11 : vector<16xf32> to vector<16x1xf32>
    %13 = vector.broadcast %12 : vector<16x1xf32> to vector<16x16xf32>
    %14 = arith.subf %10, %13 : vector<16x16xf32>
    %15 = math.exp %14 : vector<16x16xf32>
    %cst_10 = arith.constant dense<0.000000e+00> : vector<16xf32>
    %16 = vector.multi_reduction <add>, %15, %cst_10 [1] : vector<16x16xf32> to vector<16xf32>
    %17 = vector.shape_cast %16 : vector<16xf32> to vector<16x1xf32>
    %cst_11 = arith.constant 1.000000e+00 : f32
    %18 = vector.broadcast %cst_11 : f32 to vector<16x1xf32>
    %19 = arith.divf %18, %17 : vector<16x1xf32>
    %20 = vector.broadcast %19 : vector<16x1xf32> to vector<16x16xf32>
    %21 = arith.mulf %15, %20 : vector<16x16xf32>
    %c0_12 = arith.constant 0 : index
    %c0_13 = arith.constant 0 : index
    %22 = vector.load %arg7[%c0_12, %c0_13] : memref<16x16xf32, #tpu.memory_space<vmem>>, vector<16x16xf32>
    tpu.vector_store %arg7[%c0_12, %c0_13], %21 {strides = array<i32>} : memref<16x16xf32, #tpu.memory_space<vmem>>, vector<16x16xf32>,
    %23 = arith.truncf %21 : vector<16x16xf32> to vector<16x16xbf16>
    %24 = vector.shape_cast %23 : vector<16x16xbf16> to vector<16x16x1xbf16>
    %25 = vector.broadcast %24 : vector<16x16x1xbf16> to vector<16x16x128xbf16>
    %26 = arith.mulf %25, %1 : vector<16x16x128xbf16>
    %27 = arith.extf %26 : vector<16x16x128xbf16> to vector<16x16x128xf32>
    %cst_14 = arith.constant dense<0.000000e+00> : vector<16x128xf32>
    %28 = vector.multi_reduction <add>, %27, %cst_14 [1] : vector<16x16x128xf32> to vector<16x128xf32>
    %29 = arith.truncf %28 : vector<16x128xf32> to vector<16x128xbf16>
    %30 = tpu.concatenate %29, %0 in 1 : vector<16x128xbf16>, vector<16x128xbf16> -> vector<16x256xbf16>
    %c0_15 = arith.constant 0 : index
    %c0_16 = arith.constant 0 : index
    %31 = vector.load %arg5[%c0_15, %c0_16] : memref<256x128xbf16, #tpu.memory_space<vmem>>, vector<256x128xbf16>
    %cst_17 = arith.constant dense<0.000000e+00> : vector<16x128xf32>
    %32 = tpu.matmul %30, %31, %cst_17 {dimension_numbers = #tpu.dot_dimension_numbers<[1], [0], [0], [1], [0, 0, 1, 1], [], []>} : vector<16x256xbf16>, vector<256x128xbf16>, vector<16x128xf32> -> vector<16x128xf32>
    %33 = math.tanh %32 : vector<16x128xf32>
    %34 = arith.truncf %33 : vector<16x128xf32> to vector<16x128xbf16>
    %c0_18 = arith.constant 0 : index
    %c0_19 = arith.constant 0 : index
    %35 = vector.load %arg6[%c0_18, %c0_19] : memref<16x128xbf16, #tpu.memory_space<vmem>>, vector<16x128xbf16>
    tpu.vector_store %arg6[%c0_18, %c0_19], %34 {strides = array<i32>} : memref<16x128xbf16, #tpu.memory_space<vmem>>, vector<16x128xbf16>,
    return
  }
  func.func @transform_0(%arg0: i32) -> (i32, i32) {
    %c0_i32 = arith.constant 0 : i32
    %c0_i32_0 = arith.constant 0 : i32
    return %arg0, %c0_i32 : i32, i32
  }
  func.func @transform_1(%arg0: i32) -> (i32, i32, i32) {
    %c0_i32 = arith.constant 0 : i32
    %c0_i32_0 = arith.constant 0 : i32
    %c0_i32_1 = arith.constant 0 : i32
    return %arg0, %c0_i32, %c0_i32_0 : i32, i32, i32
  }
  func.func @transform_2(%arg0: i32) -> (i32, i32) {
    %c0_i32 = arith.constant 0 : i32
    %c0_i32_0 = arith.constant 0 : i32
    return %arg0, %c0_i32 : i32, i32
  }
  func.func @transform_3(%arg0: i32) -> (i32, i32) {
    %c0_i32 = arith.constant 0 : i32
    %c0_i32_0 = arith.constant 0 : i32
    %c0_i32_1 = arith.constant 0 : i32
    return %c0_i32, %c0_i32_0 : i32, i32
  }
  func.func @transform_4(%arg0: i32) -> (i32, i32) {
    %c0_i32 = arith.constant 0 : i32
    %c0_i32_0 = arith.constant 0 : i32
    %c0_i32_1 = arith.constant 0 : i32
    return %c0_i32, %c0_i32_0 : i32, i32
  }
  func.func @transform_5(%arg0: i32) -> (i32, i32) {
    %c0_i32 = arith.constant 0 : i32
    %c0_i32_0 = arith.constant 0 : i32
    return %arg0, %c0_i32 : i32, i32
  }
  func.func @transform_6(%arg0: i32) -> (i32, i32) {
    %c0_i32 = arith.constant 0 : i32
    %c0_i32_0 = arith.constant 0 : i32
    return %arg0, %c0_i32 : i32, i32
  }
}

</mosaic_0001>

<llo_original>
// kernel: tpu_custom_call.1
$region0: #{tpu_custom_call.1}
  #allocation0 [shape = 'u32[]', space=smem, size = 0x4, offset = 0x4, fixed_abs, tag = 'smem constant byte address 0x4 - core index']
  #allocation1 [shape = 'u32[144,128]{1,0:T(1,128)}', space=vmem, size = 0x12000, scoped, tag = 'internal scratch']
  %s0 = inlined_call_operand.hbm [shape: bf16[16,128], index: 0, kind: input, shape index: {}]
  %s1 = inlined_call_operand.hbm [shape: bf16[16,16,128], index: 1, kind: input, shape index: {}]
  %s2 = inlined_call_operand.hbm [shape: f32[16,16], index: 2, kind: input, shape index: {}]
  %s3 = inlined_call_operand.hbm [shape: bf16[128,128], index: 3, kind: input, shape index: {}]
  %s4 = inlined_call_operand.hbm [shape: bf16[256,128], index: 4, kind: input, shape index: {}]
  %s5 = inlined_call_operand.hbm [shape: bf16[16,128], index: 5, kind: output, shape index: {0}]
  %s6 = inlined_call_operand.hbm [shape: f32[16,16], index: 6, kind: output, shape index: {1}]
  %7 = xla_tuple %s5, %s6
  %s8 = sld [smem:[#allocation0]]
  $region58: #{tpu_custom_call.1} parent=0
    _
  %s10 = ssub.s32 1, %s8
  %s11 = scalar_select 0, %s10, %s8
  $region1: #{tpu_custom_call.1} parent=0
    #allocation2 [shape = 'u8[4096]{0}', space=vmem, size = 0x1000, scoped, tag = 'input window, operand 0, single buffered']
    #allocation3 [shape = 's32[1]{0}', space=sflag, size = 0x4, scoped, tag = 'scoped memory for tpu_custom_call.1']
    #allocation4 [shape = 's32[1]{0}', space=sflag, size = 0x4, scoped, tag = 'scoped memory for tpu_custom_call.1']
    #allocation5 [shape = 'u8[65536]{0}', space=vmem, size = 0x10000, scoped, tag = 'input window, operand 1, single buffered']
    #allocation6 [shape = 's32[1]{0}', space=sflag, size = 0x4, scoped, tag = 'scoped memory for tpu_custom_call.1']
    #allocation7 [shape = 'u8[8192]{0}', space=vmem, size = 0x2000, scoped, tag = 'input window, operand 2, single buffered']
    #allocation8 [shape = 'u8[32768]{0}', space=vmem, size = 0x8000, scoped, tag = 'input window, operand 3, single buffered']
    #allocation9 [shape = 's32[1]{0}', space=sflag, size = 0x4, scoped, tag = 'scoped memory for tpu_custom_call.1']
    #allocation10 [shape = 'u8[65536]{0}', space=vmem, size = 0x10000, scoped, tag = 'input window, operand 4, single buffered']
    #allocation11 [shape = 'u8[4096]{0}', space=vmem, size = 0x1000, scoped, tag = 'output window, operand 0, single buffered']
    #allocation12 [shape = 'u8[8192]{0}', space=vmem, size = 0x2000, scoped, tag = 'output window, operand 1, single buffered']
    #allocation13 [shape = 's32[1]{0}', space=sflag, size = 0x4, scoped, tag = 'scoped memory for tpu_custom_call.1']
    %12 = vsyncpa [#allocation3], 0
    %13 = vsyncpa [#allocation6], 0
    %14 = vsyncpa [#allocation9], 0
    %15 = vsyncpa [#allocation4], 0
    %16 = vsyncpa [#allocation13], 0
    // Predicated region
    $region2: #{tpu_custom_call.1} parent=1 // pred_check
      _
    $region3: #{tpu_custom_call.1} parent=1 // pred_check_branch
      %18 = sbr.rel (0) target = $region5
    $region4: #{tpu_custom_call.1} parent=1 // pred_region
      %s20 = ssub.s32 128, 128
      %21 = vsyncadd [#allocation3], %s20
      %s22 = sshll.u32 [#allocation2], 4
      %s23 = int_to_ptr.vmem [resolvable:$true] %s22
      %28 = dma.hbm_to_vmem [thread:$0]  %s0, 128, %s23, [#allocation3], 64, 64, 4
    $region5: #{tpu_custom_call.1} parent=1 // pred_fallthru
      _
    // Predicated region
    $region6: #{tpu_custom_call.1} parent=1 // pred_check
      _
    $region7: #{tpu_custom_call.1} parent=1 // pred_check_branch
      %30 = sbr.rel (0) target = $region9
    $region8: #{tpu_custom_call.1} parent=1 // pred_region
      %s32 = ssub.s32 2048, 2048
      %33 = vsyncadd [#allocation6], %s32
      %s34 = sshll.u32 [#allocation5], 4
      %s35 = int_to_ptr.vmem [resolvable:$true] %s34
      %40 = dma.hbm_to_vmem [thread:$0]  %s1, 2048, %s35, [#allocation6], 64, 64, 4
    $region9: #{tpu_custom_call.1} parent=1 // pred_fallthru
      _
    // Predicated region
    $region10: #{tpu_custom_call.1} parent=1 // pred_check
      _
    $region11: #{tpu_custom_call.1} parent=1 // pred_check_branch
      %42 = sbr.rel (0) target = $region13
    $region12: #{tpu_custom_call.1} parent=1 // pred_region
      %s44 = ssub.s32 256, 256
      %45 = vsyncadd [#allocation6], %s44
      %s46 = sshll.u32 [#allocation7], 4
      %s47 = int_to_ptr.vmem [resolvable:$true] %s46
      %52 = dma.hbm_to_vmem [thread:$0]  %s2, 256, %s47, [#allocation6], 128, 128, 8
    $region13: #{tpu_custom_call.1} parent=1 // pred_fallthru
      _
    // Predicated region
    $region14: #{tpu_custom_call.1} parent=1 // pred_check
      _
    $region15: #{tpu_custom_call.1} parent=1 // pred_check_branch
      %54 = sbr.rel (0) target = $region17
    $region16: #{tpu_custom_call.1} parent=1 // pred_region
      %s56 = ssub.s32 1024, 1024
      %57 = vsyncadd [#allocation9], %s56
      %s58 = sshll.u32 [#allocation8], 4
      %s59 = int_to_ptr.vmem [resolvable:$true] %s58
      %64 = dma.hbm_to_vmem [thread:$0]  %s3, 1024, %s59, [#allocation9], 64, 64, 4
    $region17: #{tpu_custom_call.1} parent=1 // pred_fallthru
      _
    // Predicated region
    $region18: #{tpu_custom_call.1} parent=1 // pred_check
      _
    $region19: #{tpu_custom_call.1} parent=1 // pred_check_branch
      %66 = sbr.rel (0) target = $region21
    $region20: #{tpu_custom_call.1} parent=1 // pred_region
      %s68 = ssub.s32 2048, 2048
      %69 = vsyncadd [#allocation9], %s68
      %s70 = sshll.u32 [#allocation10], 4
      %s71 = int_to_ptr.vmem [resolvable:$true] %s70
      %76 = dma.hbm_to_vmem [thread:$0]  %s4, 2048, %s71, [#allocation9], 64, 64, 4
    $region21: #{tpu_custom_call.1} parent=1 // pred_fallthru
      _
    // Predicated region
    $region22: #{tpu_custom_call.1} parent=1 // pred_check
      _
    $region23: #{tpu_custom_call.1} parent=1 // pred_check_branch
      %78 = sbr.rel (0) target = $region25
    $region24: #{tpu_custom_call.1} parent=1 // pred_region
      %79 = dma.done [#allocation3], 128
    $region25: #{tpu_custom_call.1} parent=1 // pred_fallthru
      _
    // Predicated region
    $region26: #{tpu_custom_call.1} parent=1 // pred_check
      _
    $region27: #{tpu_custom_call.1} parent=1 // pred_check_branch
      %81 = sbr.rel (0) target = $region29
    $region28: #{tpu_custom_call.1} parent=1 // pred_region
      %82 = dma.done [#allocation6], 2048
    $region29: #{tpu_custom_call.1} parent=1 // pred_fallthru
      _
    // Predicated region
    $region30: #{tpu_custom_call.1} parent=1 // pred_check
      _
    $region31: #{tpu_custom_call.1} parent=1 // pred_check_branch
      %84 = sbr.rel (0) target = $region33
    $region32: #{tpu_custom_call.1} parent=1 // pred_region
      %85 = dma.done [#allocation6], 256
    $region33: #{tpu_custom_call.1} parent=1 // pred_fallthru
      _
    // Predicated region
    $region34: #{tpu_custom_call.1} parent=1 // pred_check
      _
    $region35: #{tpu_custom_call.1} parent=1 // pred_check_branch
      %87 = sbr.rel (0) target = $region37
    $region36: #{tpu_custom_call.1} parent=1 // pred_region
      %88 = dma.done [#allocation9], 1024
    $region37: #{tpu_custom_call.1} parent=1 // pred_fallthru
      _
    // Predicated region
    $region38: #{tpu_custom_call.1} parent=1 // pred_check
      _
    $region39: #{tpu_custom_call.1} parent=1 // pred_check_branch
      %90 = sbr.rel (0) target = $region41
    $region40: #{tpu_custom_call.1} parent=1 // pred_region
      %91 = dma.done [#allocation9], 2048
    $region41: #{tpu_custom_call.1} parent=1 // pred_fallthru
      _
    %v93 = vld [vmem:[#allocation2] sm:$0xf]
    %v94 = vld [vmem:[#allocation2 + $0x4] sm:$0xf]
    %v95 = vld [vmem:[#allocation5] sm:$0xf]
    %v96 = vld [vmem:[#allocation5 + $0x4] sm:$0xf]
    %v97 = vld [vmem:[#allocation5 + $0x8] sm:$0xf]
    %v98 = vld [vmem:[#allocation5 + $0xc] sm:$0xf]
    %v99 = vld [vmem:[#allocation5 + $0x10] sm:$0xf]
    %v100 = vld [vmem:[#allocation5 + $0x14] sm:$0xf]
    %v101 = vld [vmem:[#allocation5 + $0x18] sm:$0xf]
    %v102 = vld [vmem:[#allocation5 + $0x1c] sm:$0xf]
    %v103 = vld [vmem:[#allocation5 + $0x20] sm:$0xf]
    %v104 = vld [vmem:[#allocation5 + $0x24] sm:$0xf]
    %v105 = vld [vmem:[#allocation5 + $0x28] sm:$0xf]
    %v106 = vld [vmem:[#allocation5 + $0x2c] sm:$0xf]
    %v107 = vld [vmem:[#allocation5 + $0x30] sm:$0xf]
    %v108 = vld [vmem:[#allocation5 + $0x34] sm:$0xf]
    %v109 = vld [vmem:[#allocation5 + $0x38] sm:$0xf]
    %v110 = vld [vmem:[#allocation5 + $0x3c] sm:$0xf]
    %v111 = vld [vmem:[#allocation5 + $0x40] sm:$0xf]
    %v112 = vld [vmem:[#allocation5 + $0x44] sm:$0xf]
    %v113 = vld [vmem:[#allocation5 + $0x48] sm:$0xf]
    %v114 = vld [vmem:[#allocation5 + $0x4c] sm:$0xf]
    %v115 = vld [vmem:[#allocation5 + $0x50] sm:$0xf]
    %v116 = vld [vmem:[#allocation5 + $0x54] sm:$0xf]
    %v117 = vld [vmem:[#allocation5 + $0x58] sm:$0xf]
    %v118 = vld [vmem:[#allocation5 + $0x5c] sm:$0xf]
    %v119 = vld [vmem:[#allocation5 + $0x60] sm:$0xf]
    %v120 = vld [vmem:[#allocation5 + $0x64] sm:$0xf]
    %v121 = vld [vmem:[#allocation5 + $0x68] sm:$0xf]
    %v122 = vld [vmem:[#allocation5 + $0x6c] sm:$0xf]
    %v123 = vld [vmem:[#allocation5 + $0x70] sm:$0xf]
    %v124 = vld [vmem:[#allocation5 + $0x74] sm:$0xf]
    %v125 = vld [vmem:[#allocation5 + $0x78] sm:$0xf]
    %v126 = vld [vmem:[#allocation5 + $0x7c] sm:$0xf]
    %v127 = vld [vmem:[#allocation8] sm:$0xf]
    %v128 = vld [vmem:[#allocation8 + $0x4] sm:$0xf]
    %v129 = vld [vmem:[#allocation8 + $0x8] sm:$0xf]
    %v130 = vld [vmem:[#allocation8 + $0xc] sm:$0xf]
    %v131 = vld [vmem:[#allocation8 + $0x10] sm:$0xf]
    %v132 = vld [vmem:[#allocation8 + $0x14] sm:$0xf]
    %v133 = vld [vmem:[#allocation8 + $0x18] sm:$0xf]
    %v134 = vld [vmem:[#allocation8 + $0x1c] sm:$0xf]
    %v135 = vld [vmem:[#allocation8 + $0x20] sm:$0xf]
    %v136 = vld [vmem:[#allocation8 + $0x24] sm:$0xf]
    %v137 = vld [vmem:[#allocation8 + $0x28] sm:$0xf]
    %v138 = vld [vmem:[#allocation8 + $0x2c] sm:$0xf]
    %v139 = vld [vmem:[#allocation8 + $0x30] sm:$0xf]
    %v140 = vld [vmem:[#allocation8 + $0x34] sm:$0xf]
    %v141 = vld [vmem:[#allocation8 + $0x38] sm:$0xf]
    %v142 = vld [vmem:[#allocation8 + $0x3c] sm:$0xf]
    %v145 = vunpack.c.l.b16 %v93
    %v146 = vunpack.c.l.b16 %v94
    %v147 = vpack.c.b16 %v146, %v145
    %v165 = vunpack.c.l.b16 %v127
    %v166 = vunpack.c.l.b16 %v128
    %v167 = vunpack.c.l.b16 %v129
    %v168 = vunpack.c.l.b16 %v130
    %v169 = vunpack.c.l.b16 %v131
    %v170 = vunpack.c.l.b16 %v132
    %v171 = vunpack.c.l.b16 %v133
    %v172 = vunpack.c.l.b16 %v134
    %v173 = vunpack.c.l.b16 %v135
    %v174 = vunpack.c.l.b16 %v136
    %v175 = vunpack.c.l.b16 %v137
    %v176 = vunpack.c.l.b16 %v138
    %v177 = vunpack.c.l.b16 %v139
    %v178 = vunpack.c.l.b16 %v140
    %v179 = vunpack.c.l.b16 %v141
    %v180 = vunpack.c.l.b16 %v142
    %v181 = vpack.c.b16 %v166, %v165
    %v182 = vpack.c.b16 %v168, %v167
    %v183 = vpack.c.b16 %v170, %v169
    %v184 = vpack.c.b16 %v172, %v171
    %v185 = vpack.c.b16 %v174, %v173
    %v186 = vpack.c.b16 %v176, %v175
    %v187 = vpack.c.b16 %v178, %v177
    %v188 = vpack.c.b16 %v180, %v179
    %197 = vmatprep.subr.bf16.mxu0 0
    %198 = vmatpush1.bf16.msra.mxu0 %v181
    %199 = vmatprep.subr.bf16.mxu0 0
    %200 = vmatpush1.bf16.msra.mxu0 %v182
    %201 = vmatprep.subr.bf16.mxu0 0
    %202 = vmatpush1.bf16.msra.mxu0 %v183
    %203 = vmatprep.subr.bf16.mxu0 0
    %204 = vmatpush1.bf16.msra.mxu0 %v184
    %205 = vmatprep.subr.bf16.mxu0 0
    %206 = vmatpush1.bf16.msra.mxu0 %v185
    %207 = vmatprep.subr.bf16.mxu0 0
    %208 = vmatpush1.bf16.msra.mxu0 %v186
    %209 = vmatprep.subr.bf16.mxu0 0
    %210 = vmatpush1.bf16.msra.mxu0 %v187
    %211 = vmatprep.subr.bf16.mxu0 0
    %212 = vmatpush1.bf16.msra.mxu0 %v188
    %213 = vmatprep.subr.bf16.mxu0 0
    %214 = vmatpush1.bf16.msra.mxu0 0
    %215 = vmatprep.subr.bf16.mxu0 0
    %216 = vmatpush1.bf16.msra.mxu0 0
    %217 = vmatprep.subr.bf16.mxu0 0
    %218 = vmatpush1.bf16.msra.mxu0 0
    %219 = vmatprep.subr.bf16.mxu0 0
    %220 = vmatpush1.bf16.msra.mxu0 0
    %221 = vmatprep.subr.bf16.mxu0 0
    %222 = vmatpush1.bf16.msra.mxu0 0
    %223 = vmatprep.subr.bf16.mxu0 0
    %224 = vmatpush1.bf16.msra.mxu0 0
    %225 = vmatprep.subr.bf16.mxu0 0
    %226 = vmatpush1.bf16.msra.mxu0 0
    %227 = vmatprep.subr.bf16.mxu0 0
    %228 = vmatpush1.bf16.msra.mxu0 0
    %229 = vmatprep.mubr.bf16.mxu0 0
    %230 = vmatmul.mubr.bf16.gmra.mrb[0].mxu0 %v147
    %v231 = vpop.f32.mrb[0].mxu0
    %v232 = vadd.f32 0.0, %v231
    %v233 = vpop.f32.mrb[0].mxu0
    %v234 = vpop.f32.mrb[0].mxu0
    %v235 = vadd.f32 0.0, %v234
    %v236 = vpop.f32.mrb[0].mxu0
    %237 = vdwg.mxu0
    %v240 = vcombine.high %v232, %v232
    %v242 = vunpack.c.l.s4 1966171168
    %v243 = vunpack.c.0.s8 %v242
    %v244 = vlaneseq
    %v245 = vshrl.u32 %v244, 7
    %v246 = vsub.s32 %v243, %v245
    %v247 = vrot.slane %v232, %v246
    %v249 = vunpack.c.l.s4 1966171168
    %v250 = vunpack.c.0.s8 %v249
    %v251 = vlaneseq
    %v252 = vshrl.u32 %v251, 7
    %v253 = vsub.s32 %v250, %v252
    %v254 = vrot.slane %v240, %v253
    %v255 = vcombine.high %v247, %v247
    %v256 = vcombine.high %v254, %v254
    %v258 = vunpack.c.l.s4 1966171168
    %v259 = vunpack.c.0.s8 %v258
    %v260 = vlaneseq
    %v261 = vshrl.u32 %v260, 7
    %v262 = vsub.s32 %v259, %v261
    %v263 = vrot.slane %v247, %v262
    %v265 = vunpack.c.l.s4 1966171168
    %v266 = vunpack.c.0.s8 %v265
    %v267 = vlaneseq
    %v268 = vshrl.u32 %v267, 7
    %v269 = vsub.s32 %v266, %v268
    %v270 = vrot.slane %v254, %v269
    %v272 = vunpack.c.l.s4 1966171168
    %v273 = vunpack.c.0.s8 %v272
    %v274 = vlaneseq
    %v275 = vshrl.u32 %v274, 7
    %v276 = vsub.s32 %v273, %v275
    %v277 = vrot.slane %v255, %v276
    %v279 = vunpack.c.l.s4 1966171168
    %v280 = vunpack.c.0.s8 %v279
    %v281 = vlaneseq
    %v282 = vshrl.u32 %v281, 7
    %v283 = vsub.s32 %v280, %v282
    %v284 = vrot.slane %v256, %v283
    %v285 = vcombine.high %v263, %v263
    %v286 = vcombine.high %v270, %v270
    %v287 = vcombine.high %v277, %v277
    %v288 = vcombine.high %v284, %v284
    %v289 = vcombine.high %v235, %v235
    %v291 = vunpack.c.l.s4 1966171168
    %v292 = vunpack.c.0.s8 %v291
    %v293 = vlaneseq
    %v294 = vshrl.u32 %v293, 7
    %v295 = vsub.s32 %v292, %v294
    %v296 = vrot.slane %v235, %v295
    %v298 = vunpack.c.l.s4 1966171168
    %v299 = vunpack.c.0.s8 %v298
    %v300 = vlaneseq
    %v301 = vshrl.u32 %v300, 7
    %v302 = vsub.s32 %v299, %v301
    %v303 = vrot.slane %v289, %v302
    %v304 = vcombine.high %v296, %v296
    %v305 = vcombine.high %v303, %v303
    %v307 = vunpack.c.l.s4 1966171168
    %v308 = vunpack.c.0.s8 %v307
    %v309 = vlaneseq
    %v310 = vshrl.u32 %v309, 7
    %v311 = vsub.s32 %v308, %v310
    %v312 = vrot.slane %v296, %v311
    %v314 = vunpack.c.l.s4 1966171168
    %v315 = vunpack.c.0.s8 %v314
    %v316 = vlaneseq
    %v317 = vshrl.u32 %v316, 7
    %v318 = vsub.s32 %v315, %v317
    %v319 = vrot.slane %v303, %v318
    %v321 = vunpack.c.l.s4 1966171168
    %v322 = vunpack.c.0.s8 %v321
    %v323 = vlaneseq
    %v324 = vshrl.u32 %v323, 7
    %v325 = vsub.s32 %v322, %v324
    %v326 = vrot.slane %v304, %v325
    %v328 = vunpack.c.l.s4 1966171168
    %v329 = vunpack.c.0.s8 %v328
    %v330 = vlaneseq
    %v331 = vshrl.u32 %v330, 7
    %v332 = vsub.s32 %v329, %v331
    %v333 = vrot.slane %v305, %v332
    %v334 = vcombine.high %v312, %v312
    %v335 = vcombine.high %v319, %v319
    %v336 = vcombine.high %v326, %v326
    %v337 = vcombine.high %v333, %v333
    %v338 = vunpack.c.l.bf16 %v95
    %v339 = vunpack.c.l.bf16 %v96
    %v340 = vunpack.c.l.bf16 %v97
    %v341 = vunpack.c.l.bf16 %v98
    %v342 = vunpack.c.l.bf16 %v99
    %v343 = vunpack.c.l.bf16 %v100
    %v344 = vunpack.c.l.bf16 %v101
    %v345 = vunpack.c.l.bf16 %v102
    %v346 = vunpack.c.l.bf16 %v103
    %v347 = vunpack.c.l.bf16 %v104
    %v348 = vunpack.c.l.bf16 %v105
    %v349 = vunpack.c.l.bf16 %v106
    %v350 = vunpack.c.l.bf16 %v107
    %v351 = vunpack.c.l.bf16 %v108
    %v352 = vunpack.c.l.bf16 %v109
    %v353 = vunpack.c.l.bf16 %v110
    %v354 = vunpack.c.l.bf16 %v111
    %v355 = vunpack.c.l.bf16 %v112
    %v356 = vunpack.c.l.bf16 %v113
    %v357 = vunpack.c.l.bf16 %v114
    %v358 = vunpack.c.l.bf16 %v115
    %v359 = vunpack.c.l.bf16 %v116
    %v360 = vunpack.c.l.bf16 %v117
    %v361 = vunpack.c.l.bf16 %v118
    %v362 = vunpack.c.l.bf16 %v119
    %v363 = vunpack.c.l.bf16 %v120
    %v364 = vunpack.c.l.bf16 %v121
    %v365 = vunpack.c.l.bf16 %v122
    %v366 = vunpack.c.l.bf16 %v123
    %v367 = vunpack.c.l.bf16 %v124
    %v368 = vunpack.c.l.bf16 %v125
    %v369 = vunpack.c.l.bf16 %v126
    %v370 = vlaneseq
    %v371 = vshrl.u32 %v370, 7
    %v372 = vsub.s32 0, %v371
    %v373 = vrot.slane %v263, %v372
    %v374 = vlaneseq
    %v375 = vshrl.u32 %v374, 7
    %v376 = vsub.s32 0, %v375
    %v377 = vrot.slane %v277, %v376
    %v378 = vlaneseq
    %v379 = vshrl.u32 %v378, 7
    %v380 = vsub.s32 0, %v379
    %v381 = vrot.slane %v285, %v380
    %v382 = vlaneseq
    %v383 = vshrl.u32 %v382, 7
    %v384 = vsub.s32 0, %v383
    %v385 = vrot.slane %v287, %v384
    %v386 = vlaneseq
    %v387 = vshrl.u32 %v386, 7
    %v388 = vsub.s32 0, %v387
    %v389 = vrot.slane %v270, %v388
    %v390 = vlaneseq
    %v391 = vshrl.u32 %v390, 7
    %v392 = vsub.s32 0, %v391
    %v393 = vrot.slane %v284, %v392
    %v394 = vlaneseq
    %v395 = vshrl.u32 %v394, 7
    %v396 = vsub.s32 0, %v395
    %v397 = vrot.slane %v286, %v396
    %v398 = vlaneseq
    %v399 = vshrl.u32 %v398, 7
    %v400 = vsub.s32 0, %v399
    %v401 = vrot.slane %v288, %v400
    %v402 = vlaneseq
    %v403 = vshrl.u32 %v402, 7
    %v404 = vsub.s32 0, %v403
    %v405 = vrot.slane %v312, %v404
    %v406 = vlaneseq
    %v407 = vshrl.u32 %v406, 7
    %v408 = vsub.s32 0, %v407
    %v409 = vrot.slane %v326, %v408
    %v410 = vlaneseq
    %v411 = vshrl.u32 %v410, 7
    %v412 = vsub.s32 0, %v411
    %v413 = vrot.slane %v334, %v412
    %v414 = vlaneseq
    %v415 = vshrl.u32 %v414, 7
    %v416 = vsub.s32 0, %v415
    %v417 = vrot.slane %v336, %v416
    %v418 = vlaneseq
    %v419 = vshrl.u32 %v418, 7
    %v420 = vsub.s32 0, %v419
    %v421 = vrot.slane %v319, %v420
    %v422 = vlaneseq
    %v423 = vshrl.u32 %v422, 7
    %v424 = vsub.s32 0, %v423
    %v425 = vrot.slane %v333, %v424
    %v426 = vlaneseq
    %v427 = vshrl.u32 %v426, 7
    %v428 = vsub.s32 0, %v427
    %v429 = vrot.slane %v335, %v428
    %v430 = vlaneseq
    %v431 = vshrl.u32 %v430, 7
    %v432 = vsub.s32 0, %v431
    %v433 = vrot.slane %v337, %v432
    %v450 = vmul.f32 %v338, %v373
    %v451 = vmul.f32 %v339, %v373
    %v452 = vmul.f32 %v340, %v377
    %v453 = vmul.f32 %v341, %v377
    %v454 = vmul.f32 %v342, %v381
    %v455 = vmul.f32 %v343, %v381
    %v456 = vmul.f32 %v344, %v385
    %v457 = vmul.f32 %v345, %v385
    %v458 = vmul.f32 %v346, %v389
    %v459 = vmul.f32 %v347, %v389
    %v460 = vmul.f32 %v348, %v393
    %v461 = vmul.f32 %v349, %v393
    %v462 = vmul.f32 %v350, %v397
    %v463 = vmul.f32 %v351, %v397
    %v464 = vmul.f32 %v352, %v401
    %v465 = vmul.f32 %v353, %v401
    %v466 = vmul.f32 %v354, %v405
    %v467 = vmul.f32 %v355, %v405
    %v468 = vmul.f32 %v356, %v409
    %v469 = vmul.f32 %v357, %v409
    %v470 = vmul.f32 %v358, %v413
    %v471 = vmul.f32 %v359, %v413
    %v472 = vmul.f32 %v360, %v417
    %v473 = vmul.f32 %v361, %v417
    %v474 = vmul.f32 %v362, %v421
    %v475 = vmul.f32 %v363, %v421
    %v476 = vmul.f32 %v364, %v425
    %v477 = vmul.f32 %v365, %v425
    %v478 = vmul.f32 %v366, %v429
    %v479 = vmul.f32 %v367, %v429
    %v480 = vmul.f32 %v368, %v433
    %v481 = vmul.f32 %v369, %v433
    %482 = vadd.xlane.f32.xlu0 %v450
    %v483 = vpop.xlane.xlu0 %482
    %484 = vadd.xlane.f32.xlu0 %v451
    %v485 = vpop.xlane.xlu0 %484
    %486 = vadd.xlane.f32.xlu0 %v452
    %v487 = vpop.xlane.xlu0 %486
    %488 = vadd.xlane.f32.xlu0 %v453
    %v489 = vpop.xlane.xlu0 %488
    %490 = vadd.xlane.f32.xlu0 %v454
    %v491 = vpop.xlane.xlu0 %490
    %492 = vadd.xlane.f32.xlu0 %v455
    %v493 = vpop.xlane.xlu0 %492
    %494 = vadd.xlane.f32.xlu0 %v456
    %v495 = vpop.xlane.xlu0 %494
    %496 = vadd.xlane.f32.xlu0 %v457
    %v497 = vpop.xlane.xlu0 %496
    %498 = vadd.xlane.f32.xlu0 %v458
    %v499 = vpop.xlane.xlu0 %498
    %500 = vadd.xlane.f32.xlu0 %v459
    %v501 = vpop.xlane.xlu0 %500
    %502 = vadd.xlane.f32.xlu0 %v460
    %v503 = vpop.xlane.xlu0 %502
    %504 = vadd.xlane.f32.xlu0 %v461
    %v505 = vpop.xlane.xlu0 %504
    %506 = vadd.xlane.f32.xlu0 %v462
    %v507 = vpop.xlane.xlu0 %506
    %508 = vadd.xlane.f32.xlu0 %v463
    %v509 = vpop.xlane.xlu0 %508
    %510 = vadd.xlane.f32.xlu0 %v464
    %v511 = vpop.xlane.xlu0 %510
    %512 = vadd.xlane.f32.xlu0 %v465
    %v513 = vpop.xlane.xlu0 %512
    %514 = vadd.xlane.f32.xlu0 %v466
    %v515 = vpop.xlane.xlu0 %514
    %516 = vadd.xlane.f32.xlu0 %v467
    %v517 = vpop.xlane.xlu0 %516
    %518 = vadd.xlane.f32.xlu0 %v468
    %v519 = vpop.xlane.xlu0 %518
    %520 = vadd.xlane.f32.xlu0 %v469
    %v521 = vpop.xlane.xlu0 %520
    %522 = vadd.xlane.f32.xlu0 %v470
    %v523 = vpop.xlane.xlu0 %522
    %524 = vadd.xlane.f32.xlu0 %v471
    %v525 = vpop.xlane.xlu0 %524
    %526 = vadd.xlane.f32.xlu0 %v472
    %v527 = vpop.xlane.xlu0 %526
    %528 = vadd.xlane.f32.xlu0 %v473
    %v529 = vpop.xlane.xlu0 %528
    %530 = vadd.xlane.f32.xlu0 %v474
    %v531 = vpop.xlane.xlu0 %530
    %532 = vadd.xlane.f32.xlu0 %v475
    %v533 = vpop.xlane.xlu0 %532
    %534 = vadd.xlane.f32.xlu0 %v476
    %v535 = vpop.xlane.xlu0 %534
    %536 = vadd.xlane.f32.xlu0 %v477
    %v537 = vpop.xlane.xlu0 %536
    %538 = vadd.xlane.f32.xlu0 %v478
    %v539 = vpop.xlane.xlu0 %538
    %540 = vadd.xlane.f32.xlu0 %v479
    %v541 = vpop.xlane.xlu0 %540
    %542 = vadd.xlane.f32.xlu0 %v480
    %v543 = vpop.xlane.xlu0 %542
    %544 = vadd.xlane.f32.xlu0 %v481
    %v545 = vpop.xlane.xlu0 %544
    %v546 = vld [vmem:[#allocation7] sm:$0xff]
    %v547 = vld [vmem:[#allocation7 + $0x8] sm:$0xff]
    %v550 = vlaneseq
    %v551 = vshrl.u32 %v550, 7
    %v552 = vsub.s32 0, %v551
    %v553 = vrot.slane %v546, %v552
    %555 = vbcast.lane.b32.xlu0 %v553, 256
    %v556 = vpop.permute.xlu0 %555
    %s558 = sor.u32 256, 8
    %559 = vbcast.lane.b32.xlu0 %v553, %s558
    %v560 = vpop.permute.xlu0 %559
    %v561 = vlaneseq
    %v562 = vshrl.u32 %v561, 7
    %v563 = vsub.s32 1, %v562
    %v564 = vrot.slane %v546, %v563
    %566 = vbcast.lane.b32.xlu0 %v564, 256
    %v567 = vpop.permute.xlu0 %566
    %s569 = sor.u32 256, 8
    %570 = vbcast.lane.b32.xlu0 %v564, %s569
    %v571 = vpop.permute.xlu0 %570
    %v572 = vlaneseq
    %v573 = vshrl.u32 %v572, 7
    %v574 = vsub.s32 2, %v573
    %v575 = vrot.slane %v546, %v574
    %577 = vbcast.lane.b32.xlu0 %v575, 256
    %v578 = vpop.permute.xlu0 %577
    %s580 = sor.u32 256, 8
    %581 = vbcast.lane.b32.xlu0 %v575, %s580
    %v582 = vpop.permute.xlu0 %581
    %v583 = vlaneseq
    %v584 = vshrl.u32 %v583, 7
    %v585 = vsub.s32 3, %v584
    %v586 = vrot.slane %v546, %v585
    %588 = vbcast.lane.b32.xlu0 %v586, 256
    %v589 = vpop.permute.xlu0 %588
    %s591 = sor.u32 256, 8
    %592 = vbcast.lane.b32.xlu0 %v586, %s591
    %v593 = vpop.permute.xlu0 %592
    %v594 = vlaneseq
    %v595 = vshrl.u32 %v594, 7
    %v596 = vsub.s32 4, %v595
    %v597 = vrot.slane %v546, %v596
    %599 = vbcast.lane.b32.xlu0 %v597, 256
    %v600 = vpop.permute.xlu0 %599
    %s602 = sor.u32 256, 8
    %603 = vbcast.lane.b32.xlu0 %v597, %s602
    %v604 = vpop.permute.xlu0 %603
    %v605 = vlaneseq
    %v606 = vshrl.u32 %v605, 7
    %v607 = vsub.s32 5, %v606
    %v608 = vrot.slane %v546, %v607
    %610 = vbcast.lane.b32.xlu0 %v608, 256
    %v611 = vpop.permute.xlu0 %610
    %s613 = sor.u32 256, 8
    %614 = vbcast.lane.b32.xlu0 %v608, %s613
    %v615 = vpop.permute.xlu0 %614
    %v616 = vlaneseq
    %v617 = vshrl.u32 %v616, 7
    %v618 = vsub.s32 6, %v617
    %v619 = vrot.slane %v546, %v618
    %621 = vbcast.lane.b32.xlu0 %v619, 256
    %v622 = vpop.permute.xlu0 %621
    %s624 = sor.u32 256, 8
    %625 = vbcast.lane.b32.xlu0 %v619, %s624
    %v626 = vpop.permute.xlu0 %625
    %v627 = vlaneseq
    %v628 = vshrl.u32 %v627, 7
    %v629 = vsub.s32 7, %v628
    %v630 = vrot.slane %v546, %v629
    %632 = vbcast.lane.b32.xlu0 %v630, 256
    %v633 = vpop.permute.xlu0 %632
    %s635 = sor.u32 256, 8
    %636 = vbcast.lane.b32.xlu0 %v630, %s635
    %v637 = vpop.permute.xlu0 %636
    %v638 = vlaneseq
    %v639 = vshrl.u32 %v638, 7
    %v640 = vsub.s32 0, %v639
    %v641 = vrot.slane %v547, %v640
    %643 = vbcast.lane.b32.xlu0 %v641, 256
    %v644 = vpop.permute.xlu0 %643
    %s646 = sor.u32 256, 8
    %647 = vbcast.lane.b32.xlu0 %v641, %s646
    %v648 = vpop.permute.xlu0 %647
    %v649 = vlaneseq
    %v650 = vshrl.u32 %v649, 7
    %v651 = vsub.s32 1, %v650
    %v652 = vrot.slane %v547, %v651
    %654 = vbcast.lane.b32.xlu0 %v652, 256
    %v655 = vpop.permute.xlu0 %654
    %s657 = sor.u32 256, 8
    %658 = vbcast.lane.b32.xlu0 %v652, %s657
    %v659 = vpop.permute.xlu0 %658
    %v660 = vlaneseq
    %v661 = vshrl.u32 %v660, 7
    %v662 = vsub.s32 2, %v661
    %v663 = vrot.slane %v547, %v662
    %665 = vbcast.lane.b32.xlu0 %v663, 256
    %v666 = vpop.permute.xlu0 %665
    %s668 = sor.u32 256, 8
    %669 = vbcast.lane.b32.xlu0 %v663, %s668
    %v670 = vpop.permute.xlu0 %669
    %v671 = vlaneseq
    %v672 = vshrl.u32 %v671, 7
    %v673 = vsub.s32 3, %v672
    %v674 = vrot.slane %v547, %v673
    %676 = vbcast.lane.b32.xlu0 %v674, 256
    %v677 = vpop.permute.xlu0 %676
    %s679 = sor.u32 256, 8
    %680 = vbcast.lane.b32.xlu0 %v674, %s679
    %v681 = vpop.permute.xlu0 %680
    %v682 = vlaneseq
    %v683 = vshrl.u32 %v682, 7
    %v684 = vsub.s32 4, %v683
    %v685 = vrot.slane %v547, %v684
    %687 = vbcast.lane.b32.xlu0 %v685, 256
    %v688 = vpop.permute.xlu0 %687
    %s690 = sor.u32 256, 8
    %691 = vbcast.lane.b32.xlu0 %v685, %s690
    %v692 = vpop.permute.xlu0 %691
    %v693 = vlaneseq
    %v694 = vshrl.u32 %v693, 7
    %v695 = vsub.s32 5, %v694
    %v696 = vrot.slane %v547, %v695
    %698 = vbcast.lane.b32.xlu0 %v696, 256
    %v699 = vpop.permute.xlu0 %698
    %s701 = sor.u32 256, 8
    %702 = vbcast.lane.b32.xlu0 %v696, %s701
    %v703 = vpop.permute.xlu0 %702
    %v704 = vlaneseq
    %v705 = vshrl.u32 %v704, 7
    %v706 = vsub.s32 6, %v705
    %v707 = vrot.slane %v547, %v706
    %709 = vbcast.lane.b32.xlu0 %v707, 256
    %v710 = vpop.permute.xlu0 %709
    %s712 = sor.u32 256, 8
    %713 = vbcast.lane.b32.xlu0 %v707, %s712
    %v714 = vpop.permute.xlu0 %713
    %v715 = vlaneseq
    %v716 = vshrl.u32 %v715, 7
    %v717 = vsub.s32 7, %v716
    %v718 = vrot.slane %v547, %v717
    %720 = vbcast.lane.b32.xlu0 %v718, 256
    %v721 = vpop.permute.xlu0 %720
    %s723 = sor.u32 256, 8
    %724 = vbcast.lane.b32.xlu0 %v718, %s723
    %v725 = vpop.permute.xlu0 %724
    %v758 = vadd.f32 %v483, %v556
    %v759 = vadd.f32 %v485, %v560
    %v760 = vadd.f32 %v487, %v567
    %v761 = vadd.f32 %v489, %v571
    %v762 = vadd.f32 %v491, %v578
    %v763 = vadd.f32 %v493, %v582
    %v764 = vadd.f32 %v495, %v589
    %v765 = vadd.f32 %v497, %v593
    %v766 = vadd.f32 %v499, %v600
    %v767 = vadd.f32 %v501, %v604
    %v768 = vadd.f32 %v503, %v611
    %v769 = vadd.f32 %v505, %v615
    %v770 = vadd.f32 %v507, %v622
    %v771 = vadd.f32 %v509, %v626
    %v772 = vadd.f32 %v511, %v633
    %v773 = vadd.f32 %v513, %v637
    %v774 = vadd.f32 %v515, %v644
    %v775 = vadd.f32 %v517, %v648
    %v776 = vadd.f32 %v519, %v655
    %v777 = vadd.f32 %v521, %v659
    %v778 = vadd.f32 %v523, %v666
    %v779 = vadd.f32 %v525, %v670
    %v780 = vadd.f32 %v527, %v677
    %v781 = vadd.f32 %v529, %v681
    %v782 = vadd.f32 %v531, %v688
    %v783 = vadd.f32 %v533, %v692
    %v784 = vadd.f32 %v535, %v699
    %v785 = vadd.f32 %v537, %v703
    %v786 = vadd.f32 %v539, %v710
    %v787 = vadd.f32 %v541, %v714
    %v788 = vadd.f32 %v543, %v721
    %v789 = vadd.f32 %v545, %v725
    %822 = vset.pattern.permute.xlu0 0
    %823 = vperm.xlu0 %822, %v758
    %v824 = vpop.permute.xlu0 %823
    %825 = vset.pattern.permute.xlu0 0
    %826 = vperm.xlu0 %825, %v759
    %v827 = vpop.permute.xlu0 %826
    %828 = vset.pattern.permute.xlu0 0
    %829 = vperm.xlu0 %828, %v760
    %v830 = vpop.permute.xlu0 %829
    %831 = vset.pattern.permute.xlu0 0
    %832 = vperm.xlu0 %831, %v761
    %v833 = vpop.permute.xlu0 %832
    %834 = vset.pattern.permute.xlu0 0
    %835 = vperm.xlu0 %834, %v762
    %v836 = vpop.permute.xlu0 %835
    %837 = vset.pattern.permute.xlu0 0
    %838 = vperm.xlu0 %837, %v763
    %v839 = vpop.permute.xlu0 %838
    %840 = vset.pattern.permute.xlu0 0
    %841 = vperm.xlu0 %840, %v764
    %v842 = vpop.permute.xlu0 %841
    %843 = vset.pattern.permute.xlu0 0
    %844 = vperm.xlu0 %843, %v765
    %v845 = vpop.permute.xlu0 %844
    %846 = vset.pattern.permute.xlu0 0
    %847 = vperm.xlu0 %846, %v766
    %v848 = vpop.permute.xlu0 %847
    %849 = vset.pattern.permute.xlu0 0
    %850 = vperm.xlu0 %849, %v767
    %v851 = vpop.permute.xlu0 %850
    %852 = vset.pattern.permute.xlu0 0
    %853 = vperm.xlu0 %852, %v768
    %v854 = vpop.permute.xlu0 %853
    %855 = vset.pattern.permute.xlu0 0
    %856 = vperm.xlu0 %855, %v769
    %v857 = vpop.permute.xlu0 %856
    %858 = vset.pattern.permute.xlu0 0
    %859 = vperm.xlu0 %858, %v770
    %v860 = vpop.permute.xlu0 %859
    %861 = vset.pattern.permute.xlu0 0
    %862 = vperm.xlu0 %861, %v771
    %v863 = vpop.permute.xlu0 %862
    %864 = vset.pattern.permute.xlu0 0
    %865 = vperm.xlu0 %864, %v772
    %v866 = vpop.permute.xlu0 %865
    %867 = vset.pattern.permute.xlu0 0
    %868 = vperm.xlu0 %867, %v773
    %v869 = vpop.permute.xlu0 %868
    %870 = vset.pattern.permute.xlu0 0
    %871 = vperm.xlu0 %870, %v774
    %v872 = vpop.permute.xlu0 %871
    %873 = vset.pattern.permute.xlu0 0
    %874 = vperm.xlu0 %873, %v775
    %v875 = vpop.permute.xlu0 %874
    %876 = vset.pattern.permute.xlu0 0
    %877 = vperm.xlu0 %876, %v776
    %v878 = vpop.permute.xlu0 %877
    %879 = vset.pattern.permute.xlu0 0
    %880 = vperm.xlu0 %879, %v777
    %v881 = vpop.permute.xlu0 %880
    %882 = vset.pattern.permute.xlu0 0
    %883 = vperm.xlu0 %882, %v778
    %v884 = vpop.permute.xlu0 %883
    %885 = vset.pattern.permute.xlu0 0
    %886 = vperm.xlu0 %885, %v779
    %v887 = vpop.permute.xlu0 %886
    %888 = vset.pattern.permute.xlu0 0
    %889 = vperm.xlu0 %888, %v780
    %v890 = vpop.permute.xlu0 %889
    %891 = vset.pattern.permute.xlu0 0
    %892 = vperm.xlu0 %891, %v781
    %v893 = vpop.permute.xlu0 %892
    %894 = vset.pattern.permute.xlu0 0
    %895 = vperm.xlu0 %894, %v782
    %v896 = vpop.permute.xlu0 %895
    %897 = vset.pattern.permute.xlu0 0
    %898 = vperm.xlu0 %897, %v783
    %v899 = vpop.permute.xlu0 %898
    %900 = vset.pattern.permute.xlu0 0
    %901 = vperm.xlu0 %900, %v784
    %v902 = vpop.permute.xlu0 %901
    %903 = vset.pattern.permute.xlu0 0
    %904 = vperm.xlu0 %903, %v785
    %v905 = vpop.permute.xlu0 %904
    %906 = vset.pattern.permute.xlu0 0
    %907 = vperm.xlu0 %906, %v786
    %v908 = vpop.permute.xlu0 %907
    %909 = vset.pattern.permute.xlu0 0
    %910 = vperm.xlu0 %909, %v787
    %v911 = vpop.permute.xlu0 %910
    %912 = vset.pattern.permute.xlu0 0
    %913 = vperm.xlu0 %912, %v788
    %v914 = vpop.permute.xlu0 %913
    %915 = vset.pattern.permute.xlu0 0
    %916 = vperm.xlu0 %915, %v789
    %v917 = vpop.permute.xlu0 %916
    %v918 = vlaneseq
    %v919 = vand.u32 %v918, 127
    %v920 = vlaneseq
    %v921 = vshrl.u32 %v920, 7
    %v922 = vsub.s32 %v919, %v921
    %v923 = vrot.slane %v824, %v922
    %v924 = vadd.s32 %v919, 4294967288
    %v925 = vlaneseq
    %v926 = vshrl.u32 %v925, 7
    %v927 = vsub.s32 %v924, %v926
    %v928 = vrot.slane %v827, %v927
    %vm929 = vcmask 130112
    %v930 = vsel %vm929, %v928, %v923
    %v931 = vlaneseq
    %v932 = vshrl.u32 %v931, 7
    %v933 = vsub.s32 %v919, %v932
    %v934 = vrot.slane %v830, %v933
    %v935 = vlaneseq
    %v936 = vshrl.u32 %v935, 7
    %v937 = vsub.s32 %v924, %v936
    %v938 = vrot.slane %v833, %v937
    %v939 = vsel %vm929, %v938, %v934
    %v940 = vlaneseq
    %v941 = vshrl.u32 %v940, 7
    %v942 = vsub.s32 %v919, %v941
    %v943 = vrot.slane %v836, %v942
    %v944 = vlaneseq
    %v945 = vshrl.u32 %v944, 7
    %v946 = vsub.s32 %v924, %v945
    %v947 = vrot.slane %v839, %v946
    %v948 = vsel %vm929, %v947, %v943
    %v949 = vlaneseq
    %v950 = vshrl.u32 %v949, 7
    %v951 = vsub.s32 %v919, %v950
    %v952 = vrot.slane %v842, %v951
    %v953 = vlaneseq
    %v954 = vshrl.u32 %v953, 7
    %v955 = vsub.s32 %v924, %v954
    %v956 = vrot.slane %v845, %v955
    %v957 = vsel %vm929, %v956, %v952
    %v958 = vlaneseq
    %v959 = vshrl.u32 %v958, 7
    %v960 = vsub.s32 %v919, %v959
    %v961 = vrot.slane %v848, %v960
    %v962 = vlaneseq
    %v963 = vshrl.u32 %v962, 7
    %v964 = vsub.s32 %v924, %v963
    %v965 = vrot.slane %v851, %v964
    %v966 = vsel %vm929, %v965, %v961
    %v967 = vlaneseq
    %v968 = vshrl.u32 %v967, 7
    %v969 = vsub.s32 %v919, %v968
    %v970 = vrot.slane %v854, %v969
    %v971 = vlaneseq
    %v972 = vshrl.u32 %v971, 7
    %v973 = vsub.s32 %v924, %v972
    %v974 = vrot.slane %v857, %v973
    %v975 = vsel %vm929, %v974, %v970
    %v976 = vlaneseq
    %v977 = vshrl.u32 %v976, 7
    %v978 = vsub.s32 %v919, %v977
    %v979 = vrot.slane %v860, %v978
    %v980 = vlaneseq
    %v981 = vshrl.u32 %v980, 7
    %v982 = vsub.s32 %v924, %v981
    %v983 = vrot.slane %v863, %v982
    %v984 = vsel %vm929, %v983, %v979
    %v985 = vlaneseq
    %v986 = vshrl.u32 %v985, 7
    %v987 = vsub.s32 %v919, %v986
    %v988 = vrot.slane %v866, %v987
    %v989 = vlaneseq
    %v990 = vshrl.u32 %v989, 7
    %v991 = vsub.s32 %v924, %v990
    %v992 = vrot.slane %v869, %v991
    %v993 = vsel %vm929, %v992, %v988
    %v994 = vlaneseq
    %v995 = vshrl.u32 %v994, 7
    %v996 = vsub.s32 %v919, %v995
    %v997 = vrot.slane %v872, %v996
    %v998 = vlaneseq
    %v999 = vshrl.u32 %v998, 7
    %v1000 = vsub.s32 %v924, %v999
    %v1001 = vrot.slane %v875, %v1000
    %v1002 = vsel %vm929, %v1001, %v997
    %v1003 = vlaneseq
    %v1004 = vshrl.u32 %v1003, 7
    %v1005 = vsub.s32 %v919, %v1004
    %v1006 = vrot.slane %v878, %v1005
    %v1007 = vlaneseq
    %v1008 = vshrl.u32 %v1007, 7
    %v1009 = vsub.s32 %v924, %v1008
    %v1010 = vrot.slane %v881, %v1009
    %v1011 = vsel %vm929, %v1010, %v1006
    %v1012 = vlaneseq
    %v1013 = vshrl.u32 %v1012, 7
    %v1014 = vsub.s32 %v919, %v1013
    %v1015 = vrot.slane %v884, %v1014
    %v1016 = vlaneseq
    %v1017 = vshrl.u32 %v1016, 7
    %v1018 = vsub.s32 %v924, %v1017
    %v1019 = vrot.slane %v887, %v1018
    %v1020 = vsel %vm929, %v1019, %v1015
    %v1021 = vlaneseq
    %v1022 = vshrl.u32 %v1021, 7
    %v1023 = vsub.s32 %v919, %v1022
    %v1024 = vrot.slane %v890, %v1023
    %v1025 = vlaneseq
    %v1026 = vshrl.u32 %v1025, 7
    %v1027 = vsub.s32 %v924, %v1026
    %v1028 = vrot.slane %v893, %v1027
    %v1029 = vsel %vm929, %v1028, %v1024
    %v1030 = vlaneseq
    %v1031 = vshrl.u32 %v1030, 7
    %v1032 = vsub.s32 %v919, %v1031
    %v1033 = vrot.slane %v896, %v1032
    %v1034 = vlaneseq
    %v1035 = vshrl.u32 %v1034, 7
    %v1036 = vsub.s32 %v924, %v1035
    %v1037 = vrot.slane %v899, %v1036
    %v1038 = vsel %vm929, %v1037, %v1033
    %v1039 = vlaneseq
    %v1040 = vshrl.u32 %v1039, 7
    %v1041 = vsub.s32 %v919, %v1040
    %v1042 = vrot.slane %v902, %v1041
    %v1043 = vlaneseq
    %v1044 = vshrl.u32 %v1043, 7
    %v1045 = vsub.s32 %v924, %v1044
    %v1046 = vrot.slane %v905, %v1045
    %v1047 = vsel %vm929, %v1046, %v1042
    %v1048 = vlaneseq
    %v1049 = vshrl.u32 %v1048, 7
    %v1050 = vsub.s32 %v919, %v1049
    %v1051 = vrot.slane %v908, %v1050
    %v1052 = vlaneseq
    %v1053 = vshrl.u32 %v1052, 7
    %v1054 = vsub.s32 %v924, %v1053
    %v1055 = vrot.slane %v911, %v1054
    %v1056 = vsel %vm929, %v1055, %v1051
    %v1057 = vlaneseq
    %v1058 = vshrl.u32 %v1057, 7
    %v1059 = vsub.s32 %v919, %v1058
    %v1060 = vrot.slane %v914, %v1059
    %v1061 = vlaneseq
    %v1062 = vshrl.u32 %v1061, 7
    %v1063 = vsub.s32 %v924, %v1062
    %v1064 = vrot.slane %v917, %v1063
    %v1065 = vsel %vm929, %v1064, %v1060
    %vm1066 = vcmask 1041409
    %v1067 = vsel %vm1066, %v939, %v930
    %vm1068 = vcmask 1042434
    %v1069 = vsel %vm1068, %v948, %v1067
    %vm1070 = vcmask 1043459
    %v1071 = vsel %vm1070, %v957, %v1069
    %vm1072 = vcmask 1044484
    %v1073 = vsel %vm1072, %v966, %v1071
    %vm1074 = vcmask 1045509
    %v1075 = vsel %vm1074, %v975, %v1073
    %vm1076 = vcmask 1046534
    %v1077 = vsel %vm1076, %v984, %v1075
    %vm1078 = vcmask 1047559
    %v1079 = vsel %vm1078, %v993, %v1077
    %v1080 = vsel %vm1066, %v1011, %v1002
    %v1081 = vsel %vm1068, %v1020, %v1080
    %v1082 = vsel %vm1070, %v1029, %v1081
    %v1083 = vsel %vm1072, %v1038, %v1082
    %v1084 = vsel %vm1074, %v1047, %v1083
    %v1085 = vsel %vm1076, %v1056, %v1084
    %v1086 = vsel %vm1078, %v1065, %v1085
    %vm1089 = vcmask 130048
    %v1090 = vsel %vm1089, %v1079, -inf
    %1091 = vmax.xlane.f32.xlu0 %v1090
    %v1092 = vpop.xlane.xlu0 %1091
    %v1093 = vsel %vm1089, %v1086, -inf
    %1094 = vmax.xlane.f32.xlu0 %v1093
    %v1095 = vpop.xlane.xlu0 %1094
    %v1098 = vlaneseq
    %v1099 = vshrl.u32 %v1098, 7
    %v1100 = vsub.s32 0, %v1099
    %v1101 = vrot.slane %v1092, %v1100
    %v1102 = vlaneseq
    %v1103 = vshrl.u32 %v1102, 7
    %v1104 = vsub.s32 1, %v1103
    %v1105 = vrot.slane %v1092, %v1104
    %v1106 = vlaneseq
    %v1107 = vshrl.u32 %v1106, 7
    %v1108 = vsub.s32 2, %v1107
    %v1109 = vrot.slane %v1092, %v1108
    %v1110 = vlaneseq
    %v1111 = vshrl.u32 %v1110, 7
    %v1112 = vsub.s32 3, %v1111
    %v1113 = vrot.slane %v1092, %v1112
    %v1114 = vlaneseq
    %v1115 = vshrl.u32 %v1114, 7
    %v1116 = vsub.s32 4, %v1115
    %v1117 = vrot.slane %v1092, %v1116
    %v1118 = vlaneseq
    %v1119 = vshrl.u32 %v1118, 7
    %v1120 = vsub.s32 5, %v1119
    %v1121 = vrot.slane %v1092, %v1120
    %v1122 = vlaneseq
    %v1123 = vshrl.u32 %v1122, 7
    %v1124 = vsub.s32 6, %v1123
    %v1125 = vrot.slane %v1092, %v1124
    %v1126 = vlaneseq
    %v1127 = vshrl.u32 %v1126, 7
    %v1128 = vsub.s32 7, %v1127
    %v1129 = vrot.slane %v1092, %v1128
    %v1130 = vlaneseq
    %v1131 = vshrl.u32 %v1130, 7
    %v1132 = vsub.s32 0, %v1131
    %v1133 = vrot.slane %v1095, %v1132
    %v1134 = vlaneseq
    %v1135 = vshrl.u32 %v1134, 7
    %v1136 = vsub.s32 1, %v1135
    %v1137 = vrot.slane %v1095, %v1136
    %v1138 = vlaneseq
    %v1139 = vshrl.u32 %v1138, 7
    %v1140 = vsub.s32 2, %v1139
    %v1141 = vrot.slane %v1095, %v1140
    %v1142 = vlaneseq
    %v1143 = vshrl.u32 %v1142, 7
    %v1144 = vsub.s32 3, %v1143
    %v1145 = vrot.slane %v1095, %v1144
    %v1146 = vlaneseq
    %v1147 = vshrl.u32 %v1146, 7
    %v1148 = vsub.s32 4, %v1147
    %v1149 = vrot.slane %v1095, %v1148
    %v1150 = vlaneseq
    %v1151 = vshrl.u32 %v1150, 7
    %v1152 = vsub.s32 5, %v1151
    %v1153 = vrot.slane %v1095, %v1152
    %v1154 = vlaneseq
    %v1155 = vshrl.u32 %v1154, 7
    %v1156 = vsub.s32 6, %v1155
    %v1157 = vrot.slane %v1095, %v1156
    %v1158 = vlaneseq
    %v1159 = vshrl.u32 %v1158, 7
    %v1160 = vsub.s32 7, %v1159
    %v1161 = vrot.slane %v1095, %v1160
    %v1178 = vsub.f32 %v758, %v1101
    %v1179 = vsub.f32 %v759, %v1101
    %v1180 = vsub.f32 %v760, %v1105
    %v1181 = vsub.f32 %v761, %v1105
    %v1182 = vsub.f32 %v762, %v1109
    %v1183 = vsub.f32 %v763, %v1109
    %v1184 = vsub.f32 %v764, %v1113
    %v1185 = vsub.f32 %v765, %v1113
    %v1186 = vsub.f32 %v766, %v1117
    %v1187 = vsub.f32 %v767, %v1117
    %v1188 = vsub.f32 %v768, %v1121
    %v1189 = vsub.f32 %v769, %v1121
    %v1190 = vsub.f32 %v770, %v1125
    %v1191 = vsub.f32 %v771, %v1125
    %v1192 = vsub.f32 %v772, %v1129
    %v1193 = vsub.f32 %v773, %v1129
    %v1194 = vsub.f32 %v774, %v1133
    %v1195 = vsub.f32 %v775, %v1133
    %v1196 = vsub.f32 %v776, %v1137
    %v1197 = vsub.f32 %v777, %v1137
    %v1198 = vsub.f32 %v778, %v1141
    %v1199 = vsub.f32 %v779, %v1141
    %v1200 = vsub.f32 %v780, %v1145
    %v1201 = vsub.f32 %v781, %v1145
    %v1202 = vsub.f32 %v782, %v1149
    %v1203 = vsub.f32 %v783, %v1149
    %v1204 = vsub.f32 %v784, %v1153
    %v1205 = vsub.f32 %v785, %v1153
    %v1206 = vsub.f32 %v786, %v1157
    %v1207 = vsub.f32 %v787, %v1157
    %v1208 = vsub.f32 %v788, %v1161
    %v1209 = vsub.f32 %v789, %v1161
    %v1210 = vmul.f32 %v1178, 1.442695
    %v1211 = vpow.pop %v1210
    %v1212 = vmul.f32 %v1179, 1.442695
    %v1213 = vpow.pop %v1212
    %v1214 = vmul.f32 %v1180, 1.442695
    %v1215 = vpow.pop %v1214
    %v1216 = vmul.f32 %v1181, 1.442695
    %v1217 = vpow.pop %v1216
    %v1218 = vmul.f32 %v1182, 1.442695
    %v1219 = vpow.pop %v1218
    %v1220 = vmul.f32 %v1183, 1.442695
    %v1221 = vpow.pop %v1220
    %v1222 = vmul.f32 %v1184, 1.442695
    %v1223 = vpow.pop %v1222
    %v1224 = vmul.f32 %v1185, 1.442695
    %v1225 = vpow.pop %v1224
    %v1226 = vmul.f32 %v1186, 1.442695
    %v1227 = vpow.pop %v1226
    %v1228 = vmul.f32 %v1187, 1.442695
    %v1229 = vpow.pop %v1228
    %v1230 = vmul.f32 %v1188, 1.442695
    %v1231 = vpow.pop %v1230
    %v1232 = vmul.f32 %v1189, 1.442695
    %v1233 = vpow.pop %v1232
    %v1234 = vmul.f32 %v1190, 1.442695
    %v1235 = vpow.pop %v1234
    %v1236 = vmul.f32 %v1191, 1.442695
    %v1237 = vpow.pop %v1236
    %v1238 = vmul.f32 %v1192, 1.442695
    %v1239 = vpow.pop %v1238
    %v1240 = vmul.f32 %v1193, 1.442695
    %v1241 = vpow.pop %v1240
    %v1242 = vmul.f32 %v1194, 1.442695
    %v1243 = vpow.pop %v1242
    %v1244 = vmul.f32 %v1195, 1.442695
    %v1245 = vpow.pop %v1244
    %v1246 = vmul.f32 %v1196, 1.442695
    %v1247 = vpow.pop %v1246
    %v1248 = vmul.f32 %v1197, 1.442695
    %v1249 = vpow.pop %v1248
    %v1250 = vmul.f32 %v1198, 1.442695
    %v1251 = vpow.pop %v1250
    %v1252 = vmul.f32 %v1199, 1.442695
    %v1253 = vpow.pop %v1252
    %v1254 = vmul.f32 %v1200, 1.442695
    %v1255 = vpow.pop %v1254
    %v1256 = vmul.f32 %v1201, 1.442695
    %v1257 = vpow.pop %v1256
    %v1258 = vmul.f32 %v1202, 1.442695
    %v1259 = vpow.pop %v1258
    %v1260 = vmul.f32 %v1203, 1.442695
    %v1261 = vpow.pop %v1260
    %v1262 = vmul.f32 %v1204, 1.442695
    %v1263 = vpow.pop %v1262
    %v1264 = vmul.f32 %v1205, 1.442695
    %v1265 = vpow.pop %v1264
    %v1266 = vmul.f32 %v1206, 1.442695
    %v1267 = vpow.pop %v1266
    %v1268 = vmul.f32 %v1207, 1.442695
    %v1269 = vpow.pop %v1268
    %v1270 = vmul.f32 %v1208, 1.442695
    %v1271 = vpow.pop %v1270
    %v1272 = vmul.f32 %v1209, 1.442695
    %v1273 = vpow.pop %v1272
    %1306 = vset.pattern.permute.xlu0 0
    %1307 = vperm.xlu0 %1306, %v1211
    %v1308 = vpop.permute.xlu0 %1307
    %1309 = vset.pattern.permute.xlu0 0
    %1310 = vperm.xlu0 %1309, %v1213
    %v1311 = vpop.permute.xlu0 %1310
    %1312 = vset.pattern.permute.xlu0 0
    %1313 = vperm.xlu0 %1312, %v1215
    %v1314 = vpop.permute.xlu0 %1313
    %1315 = vset.pattern.permute.xlu0 0
    %1316 = vperm.xlu0 %1315, %v1217
    %v1317 = vpop.permute.xlu0 %1316
    %1318 = vset.pattern.permute.xlu0 0
    %1319 = vperm.xlu0 %1318, %v1219
    %v1320 = vpop.permute.xlu0 %1319
    %1321 = vset.pattern.permute.xlu0 0
    %1322 = vperm.xlu0 %1321, %v1221
    %v1323 = vpop.permute.xlu0 %1322
    %1324 = vset.pattern.permute.xlu0 0
    %1325 = vperm.xlu0 %1324, %v1223
    %v1326 = vpop.permute.xlu0 %1325
    %1327 = vset.pattern.permute.xlu0 0
    %1328 = vperm.xlu0 %1327, %v1225
    %v1329 = vpop.permute.xlu0 %1328
    %1330 = vset.pattern.permute.xlu0 0
    %1331 = vperm.xlu0 %1330, %v1227
    %v1332 = vpop.permute.xlu0 %1331
    %1333 = vset.pattern.permute.xlu0 0
    %1334 = vperm.xlu0 %1333, %v1229
    %v1335 = vpop.permute.xlu0 %1334
    %1336 = vset.pattern.permute.xlu0 0
    %1337 = vperm.xlu0 %1336, %v1231
    %v1338 = vpop.permute.xlu0 %1337
    %1339 = vset.pattern.permute.xlu0 0
    %1340 = vperm.xlu0 %1339, %v1233
    %v1341 = vpop.permute.xlu0 %1340
    %1342 = vset.pattern.permute.xlu0 0
    %1343 = vperm.xlu0 %1342, %v1235
    %v1344 = vpop.permute.xlu0 %1343
    %1345 = vset.pattern.permute.xlu0 0
    %1346 = vperm.xlu0 %1345, %v1237
    %v1347 = vpop.permute.xlu0 %1346
    %1348 = vset.pattern.permute.xlu0 0
    %1349 = vperm.xlu0 %1348, %v1239
    %v1350 = vpop.permute.xlu0 %1349
    %1351 = vset.pattern.permute.xlu0 0
    %1352 = vperm.xlu0 %1351, %v1241
    %v1353 = vpop.permute.xlu0 %1352
    %1354 = vset.pattern.permute.xlu0 0
    %1355 = vperm.xlu0 %1354, %v1243
    %v1356 = vpop.permute.xlu0 %1355
    %1357 = vset.pattern.permute.xlu0 0
    %1358 = vperm.xlu0 %1357, %v1245
    %v1359 = vpop.permute.xlu0 %1358
    %1360 = vset.pattern.permute.xlu0 0
    %1361 = vperm.xlu0 %1360, %v1247
    %v1362 = vpop.permute.xlu0 %1361
    %1363 = vset.pattern.permute.xlu0 0
    %1364 = vperm.xlu0 %1363, %v1249
    %v1365 = vpop.permute.xlu0 %1364
    %1366 = vset.pattern.permute.xlu0 0
    %1367 = vperm.xlu0 %1366, %v1251
    %v1368 = vpop.permute.xlu0 %1367
    %1369 = vset.pattern.permute.xlu0 0
    %1370 = vperm.xlu0 %1369, %v1253
    %v1371 = vpop.permute.xlu0 %1370
    %1372 = vset.pattern.permute.xlu0 0
    %1373 = vperm.xlu0 %1372, %v1255
    %v1374 = vpop.permute.xlu0 %1373
    %1375 = vset.pattern.permute.xlu0 0
    %1376 = vperm.xlu0 %1375, %v1257
    %v1377 = vpop.permute.xlu0 %1376
    %1378 = vset.pattern.permute.xlu0 0
    %1379 = vperm.xlu0 %1378, %v1259
    %v1380 = vpop.permute.xlu0 %1379
    %1381 = vset.pattern.permute.xlu0 0
    %1382 = vperm.xlu0 %1381, %v1261
    %v1383 = vpop.permute.xlu0 %1382
    %1384 = vset.pattern.permute.xlu0 0
    %1385 = vperm.xlu0 %1384, %v1263
    %v1386 = vpop.permute.xlu0 %1385
    %1387 = vset.pattern.permute.xlu0 0
    %1388 = vperm.xlu0 %1387, %v1265
    %v1389 = vpop.permute.xlu0 %1388
    %1390 = vset.pattern.permute.xlu0 0
    %1391 = vperm.xlu0 %1390, %v1267
    %v1392 = vpop.permute.xlu0 %1391
    %1393 = vset.pattern.permute.xlu0 0
    %1394 = vperm.xlu0 %1393, %v1269
    %v1395 = vpop.permute.xlu0 %1394
    %1396 = vset.pattern.permute.xlu0 0
    %1397 = vperm.xlu0 %1396, %v1271
    %v1398 = vpop.permute.xlu0 %1397
    %1399 = vset.pattern.permute.xlu0 0
    %1400 = vperm.xlu0 %1399, %v1273
    %v1401 = vpop.permute.xlu0 %1400
    %v1402 = vlaneseq
    %v1403 = vshrl.u32 %v1402, 7
    %v1404 = vsub.s32 %v919, %v1403
    %v1405 = vrot.slane %v1308, %v1404
    %v1406 = vlaneseq
    %v1407 = vshrl.u32 %v1406, 7
    %v1408 = vsub.s32 %v924, %v1407
    %v1409 = vrot.slane %v1311, %v1408
    %v1410 = vsel %vm929, %v1409, %v1405
    %v1411 = vlaneseq
    %v1412 = vshrl.u32 %v1411, 7
    %v1413 = vsub.s32 %v919, %v1412
    %v1414 = vrot.slane %v1314, %v1413
    %v1415 = vlaneseq
    %v1416 = vshrl.u32 %v1415, 7
    %v1417 = vsub.s32 %v924, %v1416
    %v1418 = vrot.slane %v1317, %v1417
    %v1419 = vsel %vm929, %v1418, %v1414
    %v1420 = vlaneseq
    %v1421 = vshrl.u32 %v1420, 7
    %v1422 = vsub.s32 %v919, %v1421
    %v1423 = vrot.slane %v1320, %v1422
    %v1424 = vlaneseq
    %v1425 = vshrl.u32 %v1424, 7
    %v1426 = vsub.s32 %v924, %v1425
    %v1427 = vrot.slane %v1323, %v1426
    %v1428 = vsel %vm929, %v1427, %v1423
    %v1429 = vlaneseq
    %v1430 = vshrl.u32 %v1429, 7
    %v1431 = vsub.s32 %v919, %v1430
    %v1432 = vrot.slane %v1326, %v1431
    %v1433 = vlaneseq
    %v1434 = vshrl.u32 %v1433, 7
    %v1435 = vsub.s32 %v924, %v1434
    %v1436 = vrot.slane %v1329, %v1435
    %v1437 = vsel %vm929, %v1436, %v1432
    %v1438 = vlaneseq
    %v1439 = vshrl.u32 %v1438, 7
    %v1440 = vsub.s32 %v919, %v1439
    %v1441 = vrot.slane %v1332, %v1440
    %v1442 = vlaneseq
    %v1443 = vshrl.u32 %v1442, 7
    %v1444 = vsub.s32 %v924, %v1443
    %v1445 = vrot.slane %v1335, %v1444
    %v1446 = vsel %vm929, %v1445, %v1441
    %v1447 = vlaneseq
    %v1448 = vshrl.u32 %v1447, 7
    %v1449 = vsub.s32 %v919, %v1448
    %v1450 = vrot.slane %v1338, %v1449
    %v1451 = vlaneseq
    %v1452 = vshrl.u32 %v1451, 7
    %v1453 = vsub.s32 %v924, %v1452
    %v1454 = vrot.slane %v1341, %v1453
    %v1455 = vsel %vm929, %v1454, %v1450
    %v1456 = vlaneseq
    %v1457 = vshrl.u32 %v1456, 7
    %v1458 = vsub.s32 %v919, %v1457
    %v1459 = vrot.slane %v1344, %v1458
    %v1460 = vlaneseq
    %v1461 = vshrl.u32 %v1460, 7
    %v1462 = vsub.s32 %v924, %v1461
    %v1463 = vrot.slane %v1347, %v1462
    %v1464 = vsel %vm929, %v1463, %v1459
    %v1465 = vlaneseq
    %v1466 = vshrl.u32 %v1465, 7
    %v1467 = vsub.s32 %v919, %v1466
    %v1468 = vrot.slane %v1350, %v1467
    %v1469 = vlaneseq
    %v1470 = vshrl.u32 %v1469, 7
    %v1471 = vsub.s32 %v924, %v1470
    %v1472 = vrot.slane %v1353, %v1471
    %v1473 = vsel %vm929, %v1472, %v1468
    %v1474 = vlaneseq
    %v1475 = vshrl.u32 %v1474, 7
    %v1476 = vsub.s32 %v919, %v1475
    %v1477 = vrot.slane %v1356, %v1476
    %v1478 = vlaneseq
    %v1479 = vshrl.u32 %v1478, 7
    %v1480 = vsub.s32 %v924, %v1479
    %v1481 = vrot.slane %v1359, %v1480
    %v1482 = vsel %vm929, %v1481, %v1477
    %v1483 = vlaneseq
    %v1484 = vshrl.u32 %v1483, 7
    %v1485 = vsub.s32 %v919, %v1484
    %v1486 = vrot.slane %v1362, %v1485
    %v1487 = vlaneseq
    %v1488 = vshrl.u32 %v1487, 7
    %v1489 = vsub.s32 %v924, %v1488
    %v1490 = vrot.slane %v1365, %v1489
    %v1491 = vsel %vm929, %v1490, %v1486
    %v1492 = vlaneseq
    %v1493 = vshrl.u32 %v1492, 7
    %v1494 = vsub.s32 %v919, %v1493
    %v1495 = vrot.slane %v1368, %v1494
    %v1496 = vlaneseq
    %v1497 = vshrl.u32 %v1496, 7
    %v1498 = vsub.s32 %v924, %v1497
    %v1499 = vrot.slane %v1371, %v1498
    %v1500 = vsel %vm929, %v1499, %v1495
    %v1501 = vlaneseq
    %v1502 = vshrl.u32 %v1501, 7
    %v1503 = vsub.s32 %v919, %v1502
    %v1504 = vrot.slane %v1374, %v1503
    %v1505 = vlaneseq
    %v1506 = vshrl.u32 %v1505, 7
    %v1507 = vsub.s32 %v924, %v1506
    %v1508 = vrot.slane %v1377, %v1507
    %v1509 = vsel %vm929, %v1508, %v1504
    %v1510 = vlaneseq
    %v1511 = vshrl.u32 %v1510, 7
    %v1512 = vsub.s32 %v919, %v1511
    %v1513 = vrot.slane %v1380, %v1512
    %v1514 = vlaneseq
    %v1515 = vshrl.u32 %v1514, 7
    %v1516 = vsub.s32 %v924, %v1515
    %v1517 = vrot.slane %v1383, %v1516
    %v1518 = vsel %vm929, %v1517, %v1513
    %v1519 = vlaneseq
    %v1520 = vshrl.u32 %v1519, 7
    %v1521 = vsub.s32 %v919, %v1520
    %v1522 = vrot.slane %v1386, %v1521
    %v1523 = vlaneseq
    %v1524 = vshrl.u32 %v1523, 7
    %v1525 = vsub.s32 %v924, %v1524
    %v1526 = vrot.slane %v1389, %v1525
    %v1527 = vsel %vm929, %v1526, %v1522
    %v1528 = vlaneseq
    %v1529 = vshrl.u32 %v1528, 7
    %v1530 = vsub.s32 %v919, %v1529
    %v1531 = vrot.slane %v1392, %v1530
    %v1532 = vlaneseq
    %v1533 = vshrl.u32 %v1532, 7
    %v1534 = vsub.s32 %v924, %v1533
    %v1535 = vrot.slane %v1395, %v1534
    %v1536 = vsel %vm929, %v1535, %v1531
    %v1537 = vlaneseq
    %v1538 = vshrl.u32 %v1537, 7
    %v1539 = vsub.s32 %v919, %v1538
    %v1540 = vrot.slane %v1398, %v1539
    %v1541 = vlaneseq
    %v1542 = vshrl.u32 %v1541, 7
    %v1543 = vsub.s32 %v924, %v1542
    %v1544 = vrot.slane %v1401, %v1543
    %v1545 = vsel %vm929, %v1544, %v1540
    %v1546 = vsel %vm1066, %v1419, %v1410
    %v1547 = vsel %vm1068, %v1428, %v1546
    %v1548 = vsel %vm1070, %v1437, %v1547
    %v1549 = vsel %vm1072, %v1446, %v1548
    %v1550 = vsel %vm1074, %v1455, %v1549
    %v1551 = vsel %vm1076, %v1464, %v1550
    %v1552 = vsel %vm1078, %v1473, %v1551
    %v1553 = vsel %vm1066, %v1491, %v1482
    %v1554 = vsel %vm1068, %v1500, %v1553
    %v1555 = vsel %vm1070, %v1509, %v1554
    %v1556 = vsel %vm1072, %v1518, %v1555
    %v1557 = vsel %vm1074, %v1527, %v1556
    %v1558 = vsel %vm1076, %v1536, %v1557
    %v1559 = vsel %vm1078, %v1545, %v1558
    %v1562 = vsel %vm1089, %v1552, 0.0
    %1563 = vadd.xlane.f32.xlu0 %v1562
    %v1564 = vpop.xlane.xlu0 %1563
    %v1565 = vsel %vm1089, %v1559, 0.0
    %1566 = vadd.xlane.f32.xlu0 %v1565
    %v1567 = vpop.xlane.xlu0 %1566
    %v1568 = vrcp.pop %v1564
    %v1569 = vmul.f32 1.0, %v1568
    %v1570 = vrcp.pop %v1567
    %v1571 = vmul.f32 1.0, %v1570
    %v1574 = vlaneseq
    %v1575 = vshrl.u32 %v1574, 7
    %v1576 = vsub.s32 0, %v1575
    %v1577 = vrot.slane %v1569, %v1576
    %v1578 = vlaneseq
    %v1579 = vshrl.u32 %v1578, 7
    %v1580 = vsub.s32 1, %v1579
    %v1581 = vrot.slane %v1569, %v1580
    %v1582 = vlaneseq
    %v1583 = vshrl.u32 %v1582, 7
    %v1584 = vsub.s32 2, %v1583
    %v1585 = vrot.slane %v1569, %v1584
    %v1586 = vlaneseq
    %v1587 = vshrl.u32 %v1586, 7
    %v1588 = vsub.s32 3, %v1587
    %v1589 = vrot.slane %v1569, %v1588
    %v1590 = vlaneseq
    %v1591 = vshrl.u32 %v1590, 7
    %v1592 = vsub.s32 4, %v1591
    %v1593 = vrot.slane %v1569, %v1592
    %v1594 = vlaneseq
    %v1595 = vshrl.u32 %v1594, 7
    %v1596 = vsub.s32 5, %v1595
    %v1597 = vrot.slane %v1569, %v1596
    %v1598 = vlaneseq
    %v1599 = vshrl.u32 %v1598, 7
    %v1600 = vsub.s32 6, %v1599
    %v1601 = vrot.slane %v1569, %v1600
    %v1602 = vlaneseq
    %v1603 = vshrl.u32 %v1602, 7
    %v1604 = vsub.s32 7, %v1603
    %v1605 = vrot.slane %v1569, %v1604
    %v1606 = vlaneseq
    %v1607 = vshrl.u32 %v1606, 7
    %v1608 = vsub.s32 0, %v1607
    %v1609 = vrot.slane %v1571, %v1608
    %v1610 = vlaneseq
    %v1611 = vshrl.u32 %v1610, 7
    %v1612 = vsub.s32 1, %v1611
    %v1613 = vrot.slane %v1571, %v1612
    %v1614 = vlaneseq
    %v1615 = vshrl.u32 %v1614, 7
    %v1616 = vsub.s32 2, %v1615
    %v1617 = vrot.slane %v1571, %v1616
    %v1618 = vlaneseq
    %v1619 = vshrl.u32 %v1618, 7
    %v1620 = vsub.s32 3, %v1619
    %v1621 = vrot.slane %v1571, %v1620
    %v1622 = vlaneseq
    %v1623 = vshrl.u32 %v1622, 7
    %v1624 = vsub.s32 4, %v1623
    %v1625 = vrot.slane %v1571, %v1624
    %v1626 = vlaneseq
    %v1627 = vshrl.u32 %v1626, 7
    %v1628 = vsub.s32 5, %v1627
    %v1629 = vrot.slane %v1571, %v1628
    %v1630 = vlaneseq
    %v1631 = vshrl.u32 %v1630, 7
    %v1632 = vsub.s32 6, %v1631
    %v1633 = vrot.slane %v1571, %v1632
    %v1634 = vlaneseq
    %v1635 = vshrl.u32 %v1634, 7
    %v1636 = vsub.s32 7, %v1635
    %v1637 = vrot.slane %v1571, %v1636
    %v1654 = vmul.f32 %v1211, %v1577
    %v1655 = vmul.f32 %v1213, %v1577
    %v1656 = vmul.f32 %v1215, %v1581
    %v1657 = vmul.f32 %v1217, %v1581
    %v1658 = vmul.f32 %v1219, %v1585
    %v1659 = vmul.f32 %v1221, %v1585
    %v1660 = vmul.f32 %v1223, %v1589
    %v1661 = vmul.f32 %v1225, %v1589
    %v1662 = vmul.f32 %v1227, %v1593
    %v1663 = vmul.f32 %v1229, %v1593
    %v1664 = vmul.f32 %v1231, %v1597
    %v1665 = vmul.f32 %v1233, %v1597
    %v1666 = vmul.f32 %v1235, %v1601
    %v1667 = vmul.f32 %v1237, %v1601
    %v1668 = vmul.f32 %v1239, %v1605
    %v1669 = vmul.f32 %v1241, %v1605
    %v1670 = vmul.f32 %v1243, %v1609
    %v1671 = vmul.f32 %v1245, %v1609
    %v1672 = vmul.f32 %v1247, %v1613
    %v1673 = vmul.f32 %v1249, %v1613
    %v1674 = vmul.f32 %v1251, %v1617
    %v1675 = vmul.f32 %v1253, %v1617
    %v1676 = vmul.f32 %v1255, %v1621
    %v1677 = vmul.f32 %v1257, %v1621
    %v1678 = vmul.f32 %v1259, %v1625
    %v1679 = vmul.f32 %v1261, %v1625
    %v1680 = vmul.f32 %v1263, %v1629
    %v1681 = vmul.f32 %v1265, %v1629
    %v1682 = vmul.f32 %v1267, %v1633
    %v1683 = vmul.f32 %v1269, %v1633
    %v1684 = vmul.f32 %v1271, %v1637
    %v1685 = vmul.f32 %v1273, %v1637
    %1718 = vset.pattern.permute.xlu0 0
    %1719 = vperm.xlu0 %1718, %v1654
    %v1720 = vpop.permute.xlu0 %1719
    %1721 = vset.pattern.permute.xlu0 0
    %1722 = vperm.xlu0 %1721, %v1655
    %v1723 = vpop.permute.xlu0 %1722
    %1724 = vset.pattern.permute.xlu0 0
    %1725 = vperm.xlu0 %1724, %v1656
    %v1726 = vpop.permute.xlu0 %1725
    %1727 = vset.pattern.permute.xlu0 0
    %1728 = vperm.xlu0 %1727, %v1657
    %v1729 = vpop.permute.xlu0 %1728
    %1730 = vset.pattern.permute.xlu0 0
    %1731 = vperm.xlu0 %1730, %v1658
    %v1732 = vpop.permute.xlu0 %1731
    %1733 = vset.pattern.permute.xlu0 0
    %1734 = vperm.xlu0 %1733, %v1659
    %v1735 = vpop.permute.xlu0 %1734
    %1736 = vset.pattern.permute.xlu0 0
    %1737 = vperm.xlu0 %1736, %v1660
    %v1738 = vpop.permute.xlu0 %1737
    %1739 = vset.pattern.permute.xlu0 0
    %1740 = vperm.xlu0 %1739, %v1661
    %v1741 = vpop.permute.xlu0 %1740
    %1742 = vset.pattern.permute.xlu0 0
    %1743 = vperm.xlu0 %1742, %v1662
    %v1744 = vpop.permute.xlu0 %1743
    %1745 = vset.pattern.permute.xlu0 0
    %1746 = vperm.xlu0 %1745, %v1663
    %v1747 = vpop.permute.xlu0 %1746
    %1748 = vset.pattern.permute.xlu0 0
    %1749 = vperm.xlu0 %1748, %v1664
    %v1750 = vpop.permute.xlu0 %1749
    %1751 = vset.pattern.permute.xlu0 0
    %1752 = vperm.xlu0 %1751, %v1665
    %v1753 = vpop.permute.xlu0 %1752
    %1754 = vset.pattern.permute.xlu0 0
    %1755 = vperm.xlu0 %1754, %v1666
    %v1756 = vpop.permute.xlu0 %1755
    %1757 = vset.pattern.permute.xlu0 0
    %1758 = vperm.xlu0 %1757, %v1667
    %v1759 = vpop.permute.xlu0 %1758
    %1760 = vset.pattern.permute.xlu0 0
    %1761 = vperm.xlu0 %1760, %v1668
    %v1762 = vpop.permute.xlu0 %1761
    %1763 = vset.pattern.permute.xlu0 0
    %1764 = vperm.xlu0 %1763, %v1669
    %v1765 = vpop.permute.xlu0 %1764
    %1766 = vset.pattern.permute.xlu0 0
    %1767 = vperm.xlu0 %1766, %v1670
    %v1768 = vpop.permute.xlu0 %1767
    %1769 = vset.pattern.permute.xlu0 0
    %1770 = vperm.xlu0 %1769, %v1671
    %v1771 = vpop.permute.xlu0 %1770
    %1772 = vset.pattern.permute.xlu0 0
    %1773 = vperm.xlu0 %1772, %v1672
    %v1774 = vpop.permute.xlu0 %1773
    %1775 = vset.pattern.permute.xlu0 0
    %1776 = vperm.xlu0 %1775, %v1673
    %v1777 = vpop.permute.xlu0 %1776
    %1778 = vset.pattern.permute.xlu0 0
    %1779 = vperm.xlu0 %1778, %v1674
    %v1780 = vpop.permute.xlu0 %1779
    %1781 = vset.pattern.permute.xlu0 0
    %1782 = vperm.xlu0 %1781, %v1675
    %v1783 = vpop.permute.xlu0 %1782
    %1784 = vset.pattern.permute.xlu0 0
    %1785 = vperm.xlu0 %1784, %v1676
    %v1786 = vpop.permute.xlu0 %1785
    %1787 = vset.pattern.permute.xlu0 0
    %1788 = vperm.xlu0 %1787, %v1677
    %v1789 = vpop.permute.xlu0 %1788
    %1790 = vset.pattern.permute.xlu0 0
    %1791 = vperm.xlu0 %1790, %v1678
    %v1792 = vpop.permute.xlu0 %1791
    %1793 = vset.pattern.permute.xlu0 0
    %1794 = vperm.xlu0 %1793, %v1679
    %v1795 = vpop.permute.xlu0 %1794
    %1796 = vset.pattern.permute.xlu0 0
    %1797 = vperm.xlu0 %1796, %v1680
    %v1798 = vpop.permute.xlu0 %1797
    %1799 = vset.pattern.permute.xlu0 0
    %1800 = vperm.xlu0 %1799, %v1681
    %v1801 = vpop.permute.xlu0 %1800
    %1802 = vset.pattern.permute.xlu0 0
    %1803 = vperm.xlu0 %1802, %v1682
    %v1804 = vpop.permute.xlu0 %1803
    %1805 = vset.pattern.permute.xlu0 0
    %1806 = vperm.xlu0 %1805, %v1683
    %v1807 = vpop.permute.xlu0 %1806
    %1808 = vset.pattern.permute.xlu0 0
    %1809 = vperm.xlu0 %1808, %v1684
    %v1810 = vpop.permute.xlu0 %1809
    %1811 = vset.pattern.permute.xlu0 0
    %1812 = vperm.xlu0 %1811, %v1685
    %v1813 = vpop.permute.xlu0 %1812
    %v1814 = vlaneseq
    %v1815 = vshrl.u32 %v1814, 7
    %v1816 = vsub.s32 %v919, %v1815
    %v1817 = vrot.slane %v1720, %v1816
    %v1818 = vlaneseq
    %v1819 = vshrl.u32 %v1818, 7
    %v1820 = vsub.s32 %v924, %v1819
    %v1821 = vrot.slane %v1723, %v1820
    %v1822 = vsel %vm929, %v1821, %v1817
    %v1823 = vlaneseq
    %v1824 = vshrl.u32 %v1823, 7
    %v1825 = vsub.s32 %v919, %v1824
    %v1826 = vrot.slane %v1726, %v1825
    %v1827 = vlaneseq
    %v1828 = vshrl.u32 %v1827, 7
    %v1829 = vsub.s32 %v924, %v1828
    %v1830 = vrot.slane %v1729, %v1829
    %v1831 = vsel %vm929, %v1830, %v1826
    %v1832 = vlaneseq
    %v1833 = vshrl.u32 %v1832, 7
    %v1834 = vsub.s32 %v919, %v1833
    %v1835 = vrot.slane %v1732, %v1834
    %v1836 = vlaneseq
    %v1837 = vshrl.u32 %v1836, 7
    %v1838 = vsub.s32 %v924, %v1837
    %v1839 = vrot.slane %v1735, %v1838
    %v1840 = vsel %vm929, %v1839, %v1835
    %v1841 = vlaneseq
    %v1842 = vshrl.u32 %v1841, 7
    %v1843 = vsub.s32 %v919, %v1842
    %v1844 = vrot.slane %v1738, %v1843
    %v1845 = vlaneseq
    %v1846 = vshrl.u32 %v1845, 7
    %v1847 = vsub.s32 %v924, %v1846
    %v1848 = vrot.slane %v1741, %v1847
    %v1849 = vsel %vm929, %v1848, %v1844
    %v1850 = vlaneseq
    %v1851 = vshrl.u32 %v1850, 7
    %v1852 = vsub.s32 %v919, %v1851
    %v1853 = vrot.slane %v1744, %v1852
    %v1854 = vlaneseq
    %v1855 = vshrl.u32 %v1854, 7
    %v1856 = vsub.s32 %v924, %v1855
    %v1857 = vrot.slane %v1747, %v1856
    %v1858 = vsel %vm929, %v1857, %v1853
    %v1859 = vlaneseq
    %v1860 = vshrl.u32 %v1859, 7
    %v1861 = vsub.s32 %v919, %v1860
    %v1862 = vrot.slane %v1750, %v1861
    %v1863 = vlaneseq
    %v1864 = vshrl.u32 %v1863, 7
    %v1865 = vsub.s32 %v924, %v1864
    %v1866 = vrot.slane %v1753, %v1865
    %v1867 = vsel %vm929, %v1866, %v1862
    %v1868 = vlaneseq
    %v1869 = vshrl.u32 %v1868, 7
    %v1870 = vsub.s32 %v919, %v1869
    %v1871 = vrot.slane %v1756, %v1870
    %v1872 = vlaneseq
    %v1873 = vshrl.u32 %v1872, 7
    %v1874 = vsub.s32 %v924, %v1873
    %v1875 = vrot.slane %v1759, %v1874
    %v1876 = vsel %vm929, %v1875, %v1871
    %v1877 = vlaneseq
    %v1878 = vshrl.u32 %v1877, 7
    %v1879 = vsub.s32 %v919, %v1878
    %v1880 = vrot.slane %v1762, %v1879
    %v1881 = vlaneseq
    %v1882 = vshrl.u32 %v1881, 7
    %v1883 = vsub.s32 %v924, %v1882
    %v1884 = vrot.slane %v1765, %v1883
    %v1885 = vsel %vm929, %v1884, %v1880
    %v1886 = vlaneseq
    %v1887 = vshrl.u32 %v1886, 7
    %v1888 = vsub.s32 %v919, %v1887
    %v1889 = vrot.slane %v1768, %v1888
    %v1890 = vlaneseq
    %v1891 = vshrl.u32 %v1890, 7
    %v1892 = vsub.s32 %v924, %v1891
    %v1893 = vrot.slane %v1771, %v1892
    %v1894 = vsel %vm929, %v1893, %v1889
    %v1895 = vlaneseq
    %v1896 = vshrl.u32 %v1895, 7
    %v1897 = vsub.s32 %v919, %v1896
    %v1898 = vrot.slane %v1774, %v1897
    %v1899 = vlaneseq
    %v1900 = vshrl.u32 %v1899, 7
    %v1901 = vsub.s32 %v924, %v1900
    %v1902 = vrot.slane %v1777, %v1901
    %v1903 = vsel %vm929, %v1902, %v1898
    %v1904 = vlaneseq
    %v1905 = vshrl.u32 %v1904, 7
    %v1906 = vsub.s32 %v919, %v1905
    %v1907 = vrot.slane %v1780, %v1906
    %v1908 = vlaneseq
    %v1909 = vshrl.u32 %v1908, 7
    %v1910 = vsub.s32 %v924, %v1909
    %v1911 = vrot.slane %v1783, %v1910
    %v1912 = vsel %vm929, %v1911, %v1907
    %v1913 = vlaneseq
    %v1914 = vshrl.u32 %v1913, 7
    %v1915 = vsub.s32 %v919, %v1914
    %v1916 = vrot.slane %v1786, %v1915
    %v1917 = vlaneseq
    %v1918 = vshrl.u32 %v1917, 7
    %v1919 = vsub.s32 %v924, %v1918
    %v1920 = vrot.slane %v1789, %v1919
    %v1921 = vsel %vm929, %v1920, %v1916
    %v1922 = vlaneseq
    %v1923 = vshrl.u32 %v1922, 7
    %v1924 = vsub.s32 %v919, %v1923
    %v1925 = vrot.slane %v1792, %v1924
    %v1926 = vlaneseq
    %v1927 = vshrl.u32 %v1926, 7
    %v1928 = vsub.s32 %v924, %v1927
    %v1929 = vrot.slane %v1795, %v1928
    %v1930 = vsel %vm929, %v1929, %v1925
    %v1931 = vlaneseq
    %v1932 = vshrl.u32 %v1931, 7
    %v1933 = vsub.s32 %v919, %v1932
    %v1934 = vrot.slane %v1798, %v1933
    %v1935 = vlaneseq
    %v1936 = vshrl.u32 %v1935, 7
    %v1937 = vsub.s32 %v924, %v1936
    %v1938 = vrot.slane %v1801, %v1937
    %v1939 = vsel %vm929, %v1938, %v1934
    %v1940 = vlaneseq
    %v1941 = vshrl.u32 %v1940, 7
    %v1942 = vsub.s32 %v919, %v1941
    %v1943 = vrot.slane %v1804, %v1942
    %v1944 = vlaneseq
    %v1945 = vshrl.u32 %v1944, 7
    %v1946 = vsub.s32 %v924, %v1945
    %v1947 = vrot.slane %v1807, %v1946
    %v1948 = vsel %vm929, %v1947, %v1943
    %v1949 = vlaneseq
    %v1950 = vshrl.u32 %v1949, 7
    %v1951 = vsub.s32 %v919, %v1950
    %v1952 = vrot.slane %v1810, %v1951
    %v1953 = vlaneseq
    %v1954 = vshrl.u32 %v1953, 7
    %v1955 = vsub.s32 %v924, %v1954
    %v1956 = vrot.slane %v1813, %v1955
    %v1957 = vsel %vm929, %v1956, %v1952
    %v1958 = vsel %vm1066, %v1831, %v1822
    %v1959 = vsel %vm1068, %v1840, %v1958
    %v1960 = vsel %vm1070, %v1849, %v1959
    %v1961 = vsel %vm1072, %v1858, %v1960
    %v1962 = vsel %vm1074, %v1867, %v1961
    %v1963 = vsel %vm1076, %v1876, %v1962
    %v1964 = vsel %vm1078, %v1885, %v1963
    %v1965 = vsel %vm1066, %v1903, %v1894
    %v1966 = vsel %vm1068, %v1912, %v1965
    %v1967 = vsel %vm1070, %v1921, %v1966
    %v1968 = vsel %vm1072, %v1930, %v1967
    %v1969 = vsel %vm1074, %v1939, %v1968
    %v1970 = vsel %vm1076, %v1948, %v1969
    %v1971 = vsel %vm1078, %v1957, %v1970
    %1974 = vst.msk [vmem:[#allocation12] sm:$0xff] %vm1089, %v1964
    %1975 = vst.msk [vmem:[#allocation12 + $0x8] sm:$0xff] %vm1089, %v1971
    %v1976 = vpack.c.bf16 %v1655, %v1654
    %v1977 = vpack.c.bf16 %v1657, %v1656
    %v1978 = vpack.c.bf16 %v1659, %v1658
    %v1979 = vpack.c.bf16 %v1661, %v1660
    %v1980 = vpack.c.bf16 %v1663, %v1662
    %v1981 = vpack.c.bf16 %v1665, %v1664
    %v1982 = vpack.c.bf16 %v1667, %v1666
    %v1983 = vpack.c.bf16 %v1669, %v1668
    %v1984 = vpack.c.bf16 %v1671, %v1670
    %v1985 = vpack.c.bf16 %v1673, %v1672
    %v1986 = vpack.c.bf16 %v1675, %v1674
    %v1987 = vpack.c.bf16 %v1677, %v1676
    %v1988 = vpack.c.bf16 %v1679, %v1678
    %v1989 = vpack.c.bf16 %v1681, %v1680
    %v1990 = vpack.c.bf16 %v1683, %v1682
    %v1991 = vpack.c.bf16 %v1685, %v1684
    %1993 = vset.pattern.permute.xlu0 0
    %1994 = vperm.xlu0 %1993, %v1976
    %v1995 = vpop.permute.xlu0 %1994
    %1998 = vset.pattern.permute.xlu0 0
    %1999 = vperm.xlu0 %1998, %v1977
    %v2000 = vpop.permute.xlu0 %1999
    %2003 = vset.pattern.permute.xlu0 0
    %2004 = vperm.xlu0 %2003, %v1978
    %v2005 = vpop.permute.xlu0 %2004
    %2008 = vset.pattern.permute.xlu0 0
    %2009 = vperm.xlu0 %2008, %v1979
    %v2010 = vpop.permute.xlu0 %2009
    %2013 = vset.pattern.permute.xlu0 0
    %2014 = vperm.xlu0 %2013, %v1980
    %v2015 = vpop.permute.xlu0 %2014
    %2018 = vset.pattern.permute.xlu0 0
    %2019 = vperm.xlu0 %2018, %v1981
    %v2020 = vpop.permute.xlu0 %2019
    %2023 = vset.pattern.permute.xlu0 0
    %2024 = vperm.xlu0 %2023, %v1982
    %v2025 = vpop.permute.xlu0 %2024
    %2028 = vset.pattern.permute.xlu0 0
    %2029 = vperm.xlu0 %2028, %v1983
    %v2030 = vpop.permute.xlu0 %2029
    %2033 = vset.pattern.permute.xlu0 0
    %2034 = vperm.xlu0 %2033, %v1984
    %v2035 = vpop.permute.xlu0 %2034
    %2038 = vset.pattern.permute.xlu0 0
    %2039 = vperm.xlu0 %2038, %v1985
    %v2040 = vpop.permute.xlu0 %2039
    %2043 = vset.pattern.permute.xlu0 0
    %2044 = vperm.xlu0 %2043, %v1986
    %v2045 = vpop.permute.xlu0 %2044
    %2048 = vset.pattern.permute.xlu0 0
    %2049 = vperm.xlu0 %2048, %v1987
    %v2050 = vpop.permute.xlu0 %2049
    %2053 = vset.pattern.permute.xlu0 0
    %2054 = vperm.xlu0 %2053, %v1988
    %v2055 = vpop.permute.xlu0 %2054
    %2058 = vset.pattern.permute.xlu0 0
    %2059 = vperm.xlu0 %2058, %v1989
    %v2060 = vpop.permute.xlu0 %2059
    %2063 = vset.pattern.permute.xlu0 0
    %2064 = vperm.xlu0 %2063, %v1990
    %v2065 = vpop.permute.xlu0 %2064
    %2068 = vset.pattern.permute.xlu0 0
    %2069 = vperm.xlu0 %2068, %v1991
    %v2070 = vpop.permute.xlu0 %2069
    %v2104 = vunpack.c.l.b16 %v95
    %v2105 = vunpack.c.l.b16 %v96
    %v2106 = vunpack.c.l.b16 %v97
    %v2107 = vunpack.c.l.b16 %v98
    %v2108 = vunpack.c.l.b16 %v99
    %v2109 = vunpack.c.l.b16 %v100
    %v2110 = vunpack.c.l.b16 %v101
    %v2111 = vunpack.c.l.b16 %v102
    %v2112 = vunpack.c.l.b16 %v103
    %v2113 = vunpack.c.l.b16 %v104
    %v2114 = vunpack.c.l.b16 %v105
    %v2115 = vunpack.c.l.b16 %v106
    %v2116 = vunpack.c.l.b16 %v107
    %v2117 = vunpack.c.l.b16 %v108
    %v2118 = vunpack.c.l.b16 %v109
    %v2119 = vunpack.c.l.b16 %v110
    %v2120 = vunpack.c.l.b16 %v111
    %v2121 = vunpack.c.l.b16 %v112
    %v2122 = vunpack.c.l.b16 %v113
    %v2123 = vunpack.c.l.b16 %v114
    %v2124 = vunpack.c.l.b16 %v115
    %v2125 = vunpack.c.l.b16 %v116
    %v2126 = vunpack.c.l.b16 %v117
    %v2127 = vunpack.c.l.b16 %v118
    %v2128 = vunpack.c.l.b16 %v119
    %v2129 = vunpack.c.l.b16 %v120
    %v2130 = vunpack.c.l.b16 %v121
    %v2131 = vunpack.c.l.b16 %v122
    %v2132 = vunpack.c.l.b16 %v123
    %v2133 = vunpack.c.l.b16 %v124
    %v2134 = vunpack.c.l.b16 %v125
    %v2135 = vunpack.c.l.b16 %v126
    %v2136 = vpack.c.b16 %v2105, %v2104
    %v2137 = vpack.c.b16 %v2107, %v2106
    %v2138 = vpack.c.b16 %v2109, %v2108
    %v2139 = vpack.c.b16 %v2111, %v2110
    %v2140 = vpack.c.b16 %v2113, %v2112
    %v2141 = vpack.c.b16 %v2115, %v2114
    %v2142 = vpack.c.b16 %v2117, %v2116
    %v2143 = vpack.c.b16 %v2119, %v2118
    %v2144 = vpack.c.b16 %v2121, %v2120
    %v2145 = vpack.c.b16 %v2123, %v2122
    %v2146 = vpack.c.b16 %v2125, %v2124
    %v2147 = vpack.c.b16 %v2127, %v2126
    %v2148 = vpack.c.b16 %v2129, %v2128
    %v2149 = vpack.c.b16 %v2131, %v2130
    %v2150 = vpack.c.b16 %v2133, %v2132
    %v2151 = vpack.c.b16 %v2135, %v2134
    %v2168 = vmul.bf16 %v1995, %v2136
    %v2169 = vmul.bf16 %v2000, %v2137
    %v2170 = vmul.bf16 %v2005, %v2138
    %v2171 = vmul.bf16 %v2010, %v2139
    %v2172 = vmul.bf16 %v2015, %v2140
    %v2173 = vmul.bf16 %v2020, %v2141
    %v2174 = vmul.bf16 %v2025, %v2142
    %v2175 = vmul.bf16 %v2030, %v2143
    %v2176 = vmul.bf16 %v2035, %v2144
    %v2177 = vmul.bf16 %v2040, %v2145
    %v2178 = vmul.bf16 %v2045, %v2146
    %v2179 = vmul.bf16 %v2050, %v2147
    %v2180 = vmul.bf16 %v2055, %v2148
    %v2181 = vmul.bf16 %v2060, %v2149
    %v2182 = vmul.bf16 %v2065, %v2150
    %v2183 = vmul.bf16 %v2070, %v2151
    %v2184 = vunpack.c.l.bf16 %v2168
    %v2185 = vunpack.c.h.bf16 %v2168
    %v2186 = vunpack.c.l.bf16 %v2169
    %v2187 = vunpack.c.h.bf16 %v2169
    %v2188 = vunpack.c.l.bf16 %v2170
    %v2189 = vunpack.c.h.bf16 %v2170
    %v2190 = vunpack.c.l.bf16 %v2171
    %v2191 = vunpack.c.h.bf16 %v2171
    %v2192 = vunpack.c.l.bf16 %v2172
    %v2193 = vunpack.c.h.bf16 %v2172
    %v2194 = vunpack.c.l.bf16 %v2173
    %v2195 = vunpack.c.h.bf16 %v2173
    %v2196 = vunpack.c.l.bf16 %v2174
    %v2197 = vunpack.c.h.bf16 %v2174
    %v2198 = vunpack.c.l.bf16 %v2175
    %v2199 = vunpack.c.h.bf16 %v2175
    %v2200 = vunpack.c.l.bf16 %v2176
    %v2201 = vunpack.c.h.bf16 %v2176
    %v2202 = vunpack.c.l.bf16 %v2177
    %v2203 = vunpack.c.h.bf16 %v2177
    %v2204 = vunpack.c.l.bf16 %v2178
    %v2205 = vunpack.c.h.bf16 %v2178
    %v2206 = vunpack.c.l.bf16 %v2179
    %v2207 = vunpack.c.h.bf16 %v2179
    %v2208 = vunpack.c.l.bf16 %v2180
    %v2209 = vunpack.c.h.bf16 %v2180
    %v2210 = vunpack.c.l.bf16 %v2181
    %v2211 = vunpack.c.h.bf16 %v2181
    %v2212 = vunpack.c.l.bf16 %v2182
    %v2213 = vunpack.c.h.bf16 %v2182
    %v2214 = vunpack.c.l.bf16 %v2183
    %v2215 = vunpack.c.h.bf16 %v2183
    %v2216 = vadd.f32 %v2184, %v2185
    %v2217 = vrot.slane %v2216, 4
    %v2218 = vadd.f32 %v2216, %v2217
    %v2219 = vrot.slane %v2218, 2
    %v2220 = vadd.f32 %v2218, %v2219
    %v2221 = vrot.slane %v2220, 1
    %v2222 = vadd.f32 %v2220, %v2221
    %v2223 = vadd.f32 %v2186, %v2187
    %v2224 = vrot.slane %v2223, 4
    %v2225 = vadd.f32 %v2223, %v2224
    %v2226 = vrot.slane %v2225, 2
    %v2227 = vadd.f32 %v2225, %v2226
    %v2228 = vrot.slane %v2227, 1
    %v2229 = vadd.f32 %v2227, %v2228
    %v2230 = vadd.f32 %v2188, %v2189
    %v2231 = vrot.slane %v2230, 4
    %v2232 = vadd.f32 %v2230, %v2231
    %v2233 = vrot.slane %v2232, 2
    %v2234 = vadd.f32 %v2232, %v2233
    %v2235 = vrot.slane %v2234, 1
    %v2236 = vadd.f32 %v2234, %v2235
    %v2237 = vadd.f32 %v2190, %v2191
    %v2238 = vrot.slane %v2237, 4
    %v2239 = vadd.f32 %v2237, %v2238
    %v2240 = vrot.slane %v2239, 2
    %v2241 = vadd.f32 %v2239, %v2240
    %v2242 = vrot.slane %v2241, 1
    %v2243 = vadd.f32 %v2241, %v2242
    %v2244 = vadd.f32 %v2192, %v2193
    %v2245 = vrot.slane %v2244, 4
    %v2246 = vadd.f32 %v2244, %v2245
    %v2247 = vrot.slane %v2246, 2
    %v2248 = vadd.f32 %v2246, %v2247
    %v2249 = vrot.slane %v2248, 1
    %v2250 = vadd.f32 %v2248, %v2249
    %v2251 = vadd.f32 %v2194, %v2195
    %v2252 = vrot.slane %v2251, 4
    %v2253 = vadd.f32 %v2251, %v2252
    %v2254 = vrot.slane %v2253, 2
    %v2255 = vadd.f32 %v2253, %v2254
    %v2256 = vrot.slane %v2255, 1
    %v2257 = vadd.f32 %v2255, %v2256
    %v2258 = vadd.f32 %v2196, %v2197
    %v2259 = vrot.slane %v2258, 4
    %v2260 = vadd.f32 %v2258, %v2259
    %v2261 = vrot.slane %v2260, 2
    %v2262 = vadd.f32 %v2260, %v2261
    %v2263 = vrot.slane %v2262, 1
    %v2264 = vadd.f32 %v2262, %v2263
    %v2265 = vadd.f32 %v2198, %v2199
    %v2266 = vrot.slane %v2265, 4
    %v2267 = vadd.f32 %v2265, %v2266
    %v2268 = vrot.slane %v2267, 2
    %v2269 = vadd.f32 %v2267, %v2268
    %v2270 = vrot.slane %v2269, 1
    %v2271 = vadd.f32 %v2269, %v2270
    %v2272 = vadd.f32 %v2200, %v2201
    %v2273 = vrot.slane %v2272, 4
    %v2274 = vadd.f32 %v2272, %v2273
    %v2275 = vrot.slane %v2274, 2
    %v2276 = vadd.f32 %v2274, %v2275
    %v2277 = vrot.slane %v2276, 1
    %v2278 = vadd.f32 %v2276, %v2277
    %v2279 = vadd.f32 %v2202, %v2203
    %v2280 = vrot.slane %v2279, 4
    %v2281 = vadd.f32 %v2279, %v2280
    %v2282 = vrot.slane %v2281, 2
    %v2283 = vadd.f32 %v2281, %v2282
    %v2284 = vrot.slane %v2283, 1
    %v2285 = vadd.f32 %v2283, %v2284
    %v2286 = vadd.f32 %v2204, %v2205
    %v2287 = vrot.slane %v2286, 4
    %v2288 = vadd.f32 %v2286, %v2287
    %v2289 = vrot.slane %v2288, 2
    %v2290 = vadd.f32 %v2288, %v2289
    %v2291 = vrot.slane %v2290, 1
    %v2292 = vadd.f32 %v2290, %v2291
    %v2293 = vadd.f32 %v2206, %v2207
    %v2294 = vrot.slane %v2293, 4
    %v2295 = vadd.f32 %v2293, %v2294
    %v2296 = vrot.slane %v2295, 2
    %v2297 = vadd.f32 %v2295, %v2296
    %v2298 = vrot.slane %v2297, 1
    %v2299 = vadd.f32 %v2297, %v2298
    %v2300 = vadd.f32 %v2208, %v2209
    %v2301 = vrot.slane %v2300, 4
    %v2302 = vadd.f32 %v2300, %v2301
    %v2303 = vrot.slane %v2302, 2
    %v2304 = vadd.f32 %v2302, %v2303
    %v2305 = vrot.slane %v2304, 1
    %v2306 = vadd.f32 %v2304, %v2305
    %v2307 = vadd.f32 %v2210, %v2211
    %v2308 = vrot.slane %v2307, 4
    %v2309 = vadd.f32 %v2307, %v2308
    %v2310 = vrot.slane %v2309, 2
    %v2311 = vadd.f32 %v2309, %v2310
    %v2312 = vrot.slane %v2311, 1
    %v2313 = vadd.f32 %v2311, %v2312
    %v2314 = vadd.f32 %v2212, %v2213
    %v2315 = vrot.slane %v2314, 4
    %v2316 = vadd.f32 %v2314, %v2315
    %v2317 = vrot.slane %v2316, 2
    %v2318 = vadd.f32 %v2316, %v2317
    %v2319 = vrot.slane %v2318, 1
    %v2320 = vadd.f32 %v2318, %v2319
    %v2321 = vadd.f32 %v2214, %v2215
    %v2322 = vrot.slane %v2321, 4
    %v2323 = vadd.f32 %v2321, %v2322
    %v2324 = vrot.slane %v2323, 2
    %v2325 = vadd.f32 %v2323, %v2324
    %v2326 = vrot.slane %v2325, 1
    %v2327 = vadd.f32 %v2325, %v2326
    %v2328 = vpack.c.bf16 %v2222, %v2222
    %v2329 = vpack.c.bf16 %v2229, %v2229
    %v2330 = vpack.c.bf16 %v2236, %v2236
    %v2331 = vpack.c.bf16 %v2243, %v2243
    %v2332 = vpack.c.bf16 %v2250, %v2250
    %v2333 = vpack.c.bf16 %v2257, %v2257
    %v2334 = vpack.c.bf16 %v2264, %v2264
    %v2335 = vpack.c.bf16 %v2271, %v2271
    %v2336 = vpack.c.bf16 %v2278, %v2278
    %v2337 = vpack.c.bf16 %v2285, %v2285
    %v2338 = vpack.c.bf16 %v2292, %v2292
    %v2339 = vpack.c.bf16 %v2299, %v2299
    %v2340 = vpack.c.bf16 %v2306, %v2306
    %v2341 = vpack.c.bf16 %v2313, %v2313
    %v2342 = vpack.c.bf16 %v2320, %v2320
    %v2343 = vpack.c.bf16 %v2327, %v2327
    %v2360 = vunpack.c.l.b16 %v2328
    %v2361 = vunpack.c.l.b16 %v2329
    %v2362 = vunpack.c.l.b16 %v2330
    %v2363 = vunpack.c.l.b16 %v2331
    %v2364 = vunpack.c.l.b16 %v2332
    %v2365 = vunpack.c.l.b16 %v2333
    %v2366 = vunpack.c.l.b16 %v2334
    %v2367 = vunpack.c.l.b16 %v2335
    %v2368 = vunpack.c.l.b16 %v2336
    %v2369 = vunpack.c.l.b16 %v2337
    %v2370 = vunpack.c.l.b16 %v2338
    %v2371 = vunpack.c.l.b16 %v2339
    %v2372 = vunpack.c.l.b16 %v2340
    %v2373 = vunpack.c.l.b16 %v2341
    %v2374 = vunpack.c.l.b16 %v2342
    %v2375 = vunpack.c.l.b16 %v2343
    %v2376 = vsel %vm1066, %v2361, %v2360
    %v2377 = vsel %vm1068, %v2362, %v2376
    %v2378 = vsel %vm1070, %v2363, %v2377
    %v2379 = vsel %vm1072, %v2364, %v2378
    %v2380 = vsel %vm1074, %v2365, %v2379
    %v2381 = vsel %vm1076, %v2366, %v2380
    %v2382 = vsel %vm1078, %v2367, %v2381
    %v2383 = vsel %vm1066, %v2369, %v2368
    %v2384 = vsel %vm1068, %v2370, %v2383
    %v2385 = vsel %vm1070, %v2371, %v2384
    %v2386 = vsel %vm1072, %v2372, %v2385
    %v2387 = vsel %vm1074, %v2373, %v2386
    %v2388 = vsel %vm1076, %v2374, %v2387
    %v2389 = vsel %vm1078, %v2375, %v2388
    %v2390 = vpack.c.b16 %v2389, %v2382
    %v2392 = vld [vmem:[#allocation10] sm:$0xf]
    %v2393 = vld [vmem:[#allocation10 + $0x4] sm:$0xf]
    %v2394 = vld [vmem:[#allocation10 + $0x8] sm:$0xf]
    %v2395 = vld [vmem:[#allocation10 + $0xc] sm:$0xf]
    %v2396 = vld [vmem:[#allocation10 + $0x10] sm:$0xf]
    %v2397 = vld [vmem:[#allocation10 + $0x14] sm:$0xf]
    %v2398 = vld [vmem:[#allocation10 + $0x18] sm:$0xf]
    %v2399 = vld [vmem:[#allocation10 + $0x1c] sm:$0xf]
    %v2400 = vld [vmem:[#allocation10 + $0x20] sm:$0xf]
    %v2401 = vld [vmem:[#allocation10 + $0x24] sm:$0xf]
    %v2402 = vld [vmem:[#allocation10 + $0x28] sm:$0xf]
    %v2403 = vld [vmem:[#allocation10 + $0x2c] sm:$0xf]
    %v2404 = vld [vmem:[#allocation10 + $0x30] sm:$0xf]
    %v2405 = vld [vmem:[#allocation10 + $0x34] sm:$0xf]
    %v2406 = vld [vmem:[#allocation10 + $0x38] sm:$0xf]
    %v2407 = vld [vmem:[#allocation10 + $0x3c] sm:$0xf]
    %v2408 = vld [vmem:[#allocation10 + $0x40] sm:$0xf]
    %v2409 = vld [vmem:[#allocation10 + $0x44] sm:$0xf]
    %v2410 = vld [vmem:[#allocation10 + $0x48] sm:$0xf]
    %v2411 = vld [vmem:[#allocation10 + $0x4c] sm:$0xf]
    %v2412 = vld [vmem:[#allocation10 + $0x50] sm:$0xf]
    %v2413 = vld [vmem:[#allocation10 + $0x54] sm:$0xf]
    %v2414 = vld [vmem:[#allocation10 + $0x58] sm:$0xf]
    %v2415 = vld [vmem:[#allocation10 + $0x5c] sm:$0xf]
    %v2416 = vld [vmem:[#allocation10 + $0x60] sm:$0xf]
    %v2417 = vld [vmem:[#allocation10 + $0x64] sm:$0xf]
    %v2418 = vld [vmem:[#allocation10 + $0x68] sm:$0xf]
    %v2419 = vld [vmem:[#allocation10 + $0x6c] sm:$0xf]
    %v2420 = vld [vmem:[#allocation10 + $0x70] sm:$0xf]
    %v2421 = vld [vmem:[#allocation10 + $0x74] sm:$0xf]
    %v2422 = vld [vmem:[#allocation10 + $0x78] sm:$0xf]
    %v2423 = vld [vmem:[#allocation10 + $0x7c] sm:$0xf]
    %v2456 = vunpack.c.l.b16 %v2392
    %v2457 = vunpack.c.l.b16 %v2393
    %v2458 = vunpack.c.l.b16 %v2394
    %v2459 = vunpack.c.l.b16 %v2395
    %v2460 = vunpack.c.l.b16 %v2396
    %v2461 = vunpack.c.l.b16 %v2397
    %v2462 = vunpack.c.l.b16 %v2398
    %v2463 = vunpack.c.l.b16 %v2399
    %v2464 = vunpack.c.l.b16 %v2400
    %v2465 = vunpack.c.l.b16 %v2401
    %v2466 = vunpack.c.l.b16 %v2402
    %v2467 = vunpack.c.l.b16 %v2403
    %v2468 = vunpack.c.l.b16 %v2404
    %v2469 = vunpack.c.l.b16 %v2405
    %v2470 = vunpack.c.l.b16 %v2406
    %v2471 = vunpack.c.l.b16 %v2407
    %v2472 = vunpack.c.l.b16 %v2408
    %v2473 = vunpack.c.l.b16 %v2409
    %v2474 = vunpack.c.l.b16 %v2410
    %v2475 = vunpack.c.l.b16 %v2411
    %v2476 = vunpack.c.l.b16 %v2412
    %v2477 = vunpack.c.l.b16 %v2413
    %v2478 = vunpack.c.l.b16 %v2414
    %v2479 = vunpack.c.l.b16 %v2415
    %v2480 = vunpack.c.l.b16 %v2416
    %v2481 = vunpack.c.l.b16 %v2417
    %v2482 = vunpack.c.l.b16 %v2418
    %v2483 = vunpack.c.l.b16 %v2419
    %v2484 = vunpack.c.l.b16 %v2420
    %v2485 = vunpack.c.l.b16 %v2421
    %v2486 = vunpack.c.l.b16 %v2422
    %v2487 = vunpack.c.l.b16 %v2423
    %v2488 = vpack.c.b16 %v2457, %v2456
    %v2489 = vpack.c.b16 %v2459, %v2458
    %v2490 = vpack.c.b16 %v2461, %v2460
    %v2491 = vpack.c.b16 %v2463, %v2462
    %v2492 = vpack.c.b16 %v2465, %v2464
    %v2493 = vpack.c.b16 %v2467, %v2466
    %v2494 = vpack.c.b16 %v2469, %v2468
    %v2495 = vpack.c.b16 %v2471, %v2470
    %v2496 = vpack.c.b16 %v2473, %v2472
    %v2497 = vpack.c.b16 %v2475, %v2474
    %v2498 = vpack.c.b16 %v2477, %v2476
    %v2499 = vpack.c.b16 %v2479, %v2478
    %v2500 = vpack.c.b16 %v2481, %v2480
    %v2501 = vpack.c.b16 %v2483, %v2482
    %v2502 = vpack.c.b16 %v2485, %v2484
    %v2503 = vpack.c.b16 %v2487, %v2486
    %2520 = vmatprep.subr.bf16.mxu0 0
    %2521 = vmatpush1.bf16.msra.mxu0 %v2488
    %2522 = vmatprep.subr.bf16.mxu0 0
    %2523 = vmatpush1.bf16.msra.mxu0 %v2489
    %2524 = vmatprep.subr.bf16.mxu0 0
    %2525 = vmatpush1.bf16.msra.mxu0 %v2490
    %2526 = vmatprep.subr.bf16.mxu0 0
    %2527 = vmatpush1.bf16.msra.mxu0 %v2491
    %2528 = vmatprep.subr.bf16.mxu0 0
    %2529 = vmatpush1.bf16.msra.mxu0 %v2492
    %2530 = vmatprep.subr.bf16.mxu0 0
    %2531 = vmatpush1.bf16.msra.mxu0 %v2493
    %2532 = vmatprep.subr.bf16.mxu0 0
    %2533 = vmatpush1.bf16.msra.mxu0 %v2494
    %2534 = vmatprep.subr.bf16.mxu0 0
    %2535 = vmatpush1.bf16.msra.mxu0 %v2495
    %2536 = vmatprep.subr.bf16.mxu0 0
    %2537 = vmatpush1.bf16.msra.mxu0 %v2496
    %2538 = vmatprep.subr.bf16.mxu0 0
    %2539 = vmatpush1.bf16.msra.mxu0 %v2497
    %2540 = vmatprep.subr.bf16.mxu0 0
    %2541 = vmatpush1.bf16.msra.mxu0 %v2498
    %2542 = vmatprep.subr.bf16.mxu0 0
    %2543 = vmatpush1.bf16.msra.mxu0 %v2499
    %2544 = vmatprep.subr.bf16.mxu0 0
    %2545 = vmatpush1.bf16.msra.mxu0 %v2500
    %2546 = vmatprep.subr.bf16.mxu0 0
    %2547 = vmatpush1.bf16.msra.mxu0 %v2501
    %2548 = vmatprep.subr.bf16.mxu0 0
    %2549 = vmatpush1.bf16.msra.mxu0 %v2502
    %2550 = vmatprep.subr.bf16.mxu0 0
    %2551 = vmatpush1.bf16.msra.mxu0 %v2503
    %2552 = vmatprep.mubr.bf16.mxu0 %v147
    %2553 = vmatmul.mubr.bf16.gmra.mrb[0].mxu0 %v2390
    %v2554 = vpop.f32.mrb[0].mxu0
    %v2555 = vadd.f32 0.0, %v2554
    %v2556 = vpop.f32.mrb[0].mxu0
    %v2557 = vpop.f32.mrb[0].mxu0
    %v2558 = vadd.f32 0.0, %v2557
    %v2559 = vpop.f32.mrb[0].mxu0
    %2560 = vdwg.mxu0
    %v2561 = vtanh.pop %v2555
    %v2562 = vtanh.pop %v2558
    %v2563 = vpack.c.bf16 %v2562, %v2561
    %v2565 = vunpack.c.l.b16 %v2563
    %v2566 = vunpack.c.h.b16 %v2563
    %v2567 = vpack.c.b16 %v2565, %v2565
    %v2568 = vpack.c.b16 %v2566, %v2566
    %2571 = vst [vmem:[#allocation11] sm:$0xf] %v2567
    %2572 = vst [vmem:[#allocation11 + $0x4] sm:$0xf] %v2568
    // Predicated region
    $region42: #{tpu_custom_call.1} parent=1 // pred_check
      _
    $region43: #{tpu_custom_call.1} parent=1 // pred_check_branch
      %2574 = sbr.rel (0) target = $region45
    $region44: #{tpu_custom_call.1} parent=1 // pred_region
      %s2576 = ssub.s32 128, 128
      %2577 = vsyncadd [#allocation4], %s2576
      %s2578 = sshll.u32 [#allocation11], 4
      %s2579 = int_to_ptr.vmem [resolvable:$true] %s2578
      %2584 = dma.vmem_to_hbm [thread:$0]  %s2579, 128, %s5, [#allocation4], 64, 64, 4
    $region45: #{tpu_custom_call.1} parent=1 // pred_fallthru
      _
    // Predicated region
    $region46: #{tpu_custom_call.1} parent=1 // pred_check
      _
    $region47: #{tpu_custom_call.1} parent=1 // pred_check_branch
      %2586 = sbr.rel (0) target = $region49
    $region48: #{tpu_custom_call.1} parent=1 // pred_region
      %s2588 = ssub.s32 256, 256
      %2589 = vsyncadd [#allocation13], %s2588
      %s2590 = sshll.u32 [#allocation12], 4
      %s2591 = int_to_ptr.vmem [resolvable:$true] %s2590
      %2596 = dma.vmem_to_hbm [thread:$0]  %s2591, 256, %s6, [#allocation13], 128, 128, 8
    $region49: #{tpu_custom_call.1} parent=1 // pred_fallthru
      _
    // Predicated region
    $region50: #{tpu_custom_call.1} parent=1 // pred_check
      _
    $region51: #{tpu_custom_call.1} parent=1 // pred_check_branch
      %2598 = sbr.rel (0) target = $region53
    $region52: #{tpu_custom_call.1} parent=1 // pred_region
      %2599 = dma.done [#allocation4], 128
    $region53: #{tpu_custom_call.1} parent=1 // pred_fallthru
      _
    // Predicated region
    $region54: #{tpu_custom_call.1} parent=1 // pred_check
      _
    $region55: #{tpu_custom_call.1} parent=1 // pred_check_branch
      %2601 = sbr.rel (0) target = $region57
    $region56: #{tpu_custom_call.1} parent=1 // pred_region
      %2602 = dma.done [#allocation13], 256
    $region57: #{tpu_custom_call.1} parent=1 // pred_fallthru
      _
    %2603 = vsyncpa [#allocation3], 1
    %2604 = vsyncpa [#allocation6], 1
    %2605 = vsyncpa [#allocation9], 1
    %2606 = vsyncpa [#allocation4], 1
    %2607 = vsyncpa [#allocation13], 1

</llo_original>
